<compile_context>
chip_gen: v7x
topology: tpu7x:2x2x1
jax: 0.10.0
libtpu: 0.0.40
codegen_flags: <defaults>
</compile_context>

<pallas_src>
import jax
import jax.numpy as jnp
from jax.experimental import pallas as pl
from jax.experimental.pallas import tpu as pltpu


def _lambdas_kernel(x_ref, w_ref, o_ref):
    # (TM, fold*nb) @ (fold*nb, fold) in the operands' native dtype with f32
    # accumulation on the MXU.  No explicit upcast: avoids a (TM, fold*nb) f32
    # VMEM temp, VPU cast work, and multi-pass f32 MXU work (important on v5e).
    o_ref[...] = jnp.dot(x_ref[...], w_ref[...],
                         preferred_element_type=jnp.float32)


def _round_up(x, mult):
    return ((x + mult - 1) // mult) * mult


def _pick_fold(nb):
    # Largest fold (output lanes) keeping the folded row <= 4096 lanes:
    # contiguous DMA rows + small block-diagonal weight.  nb=32 -> fold=128.
    for f in (128, 64, 32, 16, 8):
        if f * nb <= 4096:
            return f
    return 8


# Below this many input bytes a fused XLA dot beats kernel-launch overhead.
_SMALL_INPUT_BYTES = 256 * 1024
# ~4 MiB input tiles: amortize the ~0.35 us per-grid-step overhead while
# keeping 2x(input tile) + weight + 2x(output tile) ~= 12 MiB of VMEM.
_TARGET_TILE_BYTES = 4 * 1024 * 1024


def _lambdas_pallas(x2d, w, fold):
    """x2d: (m, nb) with m % fold == 0; w: (nb,) float32.  Returns (m,) f32."""
    m, nb = x2d.shape
    m_fold = m // fold
    itemsize = jnp.dtype(x2d.dtype).itemsize
    row_bytes = fold * nb * itemsize

    # ~4 MiB per input tile (bf16 -> tm=512, f32 -> tm=256 at nb=32), rounded
    # to the 8-sublane granule and clamped for small inputs.
    tm = max(8, (_TARGET_TILE_BYTES // row_bytes) // 8 * 8)
    tm = min(tm, _round_up(m_fold, 8))
    # Last block may be partial: its input rows are undefined and its output
    # rows are dropped by Pallas -- safe since each output row depends only on
    # its own (in-bounds) input row.
    grid = pl.cdiv(m_fold, tm)

    # Free reshape: (m, nb) viewed as (m_fold, fold*nb) lane-dense rows.
    x_fold = jnp.reshape(x2d, (m_fold, fold * nb))

    # Block-diagonal weight in the *input* dtype: rows k*nb:(k+1)*nb of
    # column k hold w, zeros elsewhere, so out_fold[r, k] = <x[r*fold+k,:], w>.
    w_block = (w[None, :, None] *
               jnp.eye(fold, dtype=jnp.float32)[:, None, :]).reshape(
                   fold * nb, fold).astype(x2d.dtype)

    out_fold = pl.pallas_call(
        _lambdas_kernel,
        out_shape=jax.ShapeDtypeStruct((m_fold, fold), jnp.float32),
        grid=(grid,),
        in_specs=[
            # Row tiles; double-buffered by the Pallas pipeline and sharded
            # across TensorCores via the "parallel" grid axis.
            pl.BlockSpec((tm, fold * nb), lambda i: (i, 0)),
            # Constant index map -> weight fetched once, stays VMEM-resident.
            pl.BlockSpec((fold * nb, fold), lambda i: (0, 0)),
        ],
        out_specs=pl.BlockSpec((tm, fold), lambda i: (i, 0)),
        compiler_params=pltpu.CompilerParams(
            dimension_semantics=("parallel",),
            vmem_limit_bytes=32 * 1024 * 1024,
        ),
        cost_estimate=pl.CostEstimate(
            flops=2 * m_fold * (fold * nb) * fold,
            transcendentals=0,
            bytes_accessed=(m * nb * itemsize            # input
                            + m_fold * fold * 4          # output
                            + fold * nb * fold * itemsize),  # weight
        ),
    )(x_fold, w_block)

    return jnp.reshape(out_fold, (m,))


def lambdas_forward(val, weight):
    """val: (..., nb) any float dtype; weight: (1, nb) f32 (torch Linear.weight).

    Returns squeeze(val.float() @ weight.T) as float32, mirroring the PyTorch
    forward (cast to float, bias-free Linear(nb -> 1), squeeze).  Matmul runs
    at the hardware-native precision (bf16 operands / f32 accumulation), which
    matches XLA's DEFAULT-precision behaviour for f32 matmuls.
    """
    # TODO(synk): the torch sparse-tensor early-exit (val.is_sparse with zero
    # nnz -> zeros(1)) has no dense-JAX/Pallas equivalent; dense path only.
    nb = weight.shape[1]
    lead_shape = val.shape[:-1]
    m = 1
    for d in lead_shape:
        m *= d

    w = jnp.asarray(weight, jnp.float32).reshape(nb)
    x2d = jnp.reshape(val, (m, nb))
    itemsize = jnp.dtype(x2d.dtype).itemsize

    fold = _pick_fold(nb)
    m_tail = m % fold
    m_main = m - m_tail

    if m * nb * itemsize <= _SMALL_INPUT_BYTES or m_main == 0:
        # Tiny input: launch + weight-construction overhead dominates.
        out = jnp.dot(x2d.astype(jnp.float32), w)
    elif m_tail == 0:
        # Common case: zero-copy (reshape-only) Pallas path.
        out = _lambdas_pallas(x2d, w, fold)
    else:
        # Ragged tail (< fold rows): kernel on the aligned prefix, plain dot on
        # the remainder -- avoids re-padding/copying the whole input.  (The
        # prefix slice may still materialize once in XLA; only hits the rare
        # m % fold != 0 case.)
        out_main = _lambdas_pallas(x2d[:m_main], w, fold)
        out_tail = jnp.dot(x2d[m_main:].astype(jnp.float32), w)
        out = jnp.concatenate([out_main, out_tail], axis=0)

    return jnp.squeeze(jnp.reshape(out, lead_shape + (1,)))


if __name__ == "__main__":
    nb = 32          # in_features of the Linear layer
    key = jax.random.PRNGKey(0)
    kw, k1, k2, k3 = jax.random.split(key, 4)

    # Deterministic init, same shape/range as torch.nn.Linear(nb, 1).weight.
    bound = 1.0 / (nb ** 0.5)
    weight = jax.random.uniform(kw, (1, nb), jnp.float32, -bound, bound)

    def ref_fwd(v, w_dtype=jnp.float32):
        w_used = weight.astype(w_dtype).astype(jnp.float32)
        return jnp.squeeze(
            jnp.einsum("...n,on->...o", v.astype(jnp.float32), w_used))

    # 1) Small f32 case (batch=2, seq=8): exercises the small-input fast path.
    val1 = jax.random.normal(k1, (2, 8, nb), jnp.float32)
    out1 = jax.block_until_ready(lambdas_forward(val1, weight))
    assert out1.shape == (2, 8), out1.shape
    assert jnp.allclose(out1, ref_fwd(val1), atol=1e-5, rtol=1e-5)

    # 2) f32 case with a ragged tail (4*1000 = 4000 rows, 4000 % 128 = 32):
    #    exercises the Pallas path plus the prefix/tail split.  Tolerance
    #    accounts for the MXU's bf16-truncation at DEFAULT precision.
    val2 = jax.random.normal(k2, (4, 1000, nb), jnp.float32)
    out2 = jax.block_until_ready(lambdas_forward(val2, weight))
    assert out2.shape == (4, 1000), out2.shape
    assert jnp.allclose(out2, ref_fwd(val2), atol=3e-2, rtol=3e-2)

    # 3) bf16 case, 8*2000 = 16000 rows (multiple of fold=128): exercises the
    #    narrow-dtype zero-copy Pallas path with a partial last row-tile.
    #    Compare against a bf16-weight reference (kernel feeds bf16 operands).
    val3 = jax.random.normal(k3, (8, 2000, nb), jnp.float32).astype(jnp.bfloat16)
    out3 = jax.block_until_ready(lambdas_forward(val3, weight))
    assert out3.shape == (8, 2000), out3.shape
    assert jnp.allclose(out3, ref_fwd(val3, w_dtype=jnp.bfloat16),
                        atol=5e-3, rtol=5e-3)

    print("KERNEL_OK")
</pallas_src>

<mosaic_0001>
module attributes {stable_mosaic.version = 11 : i64} {
  func.func @_lambdas_kernel(%arg0: i32, %arg1: memref<32x4096xf32, #tpu.memory_space<vmem>>, %arg2: memref<4096x128xf32, #tpu.memory_space<vmem>>, %arg3: memref<32x128xf32, #tpu.memory_space<vmem>>) attributes {dimension_semantics = [#tpu.dimension_semantics<parallel>], iteration_bounds = array<i64: 1>, scalar_prefetch = 0 : i64, scratch_operands = 0 : i64, tpu.core_type = #tpu.core_type<tc>, window_params = [{transform_indices = @transform_0, window_bounds = array<i64: 32, 4096>}, {pipeline_mode = #tpu.pipeline_mode<synchronous>, transform_indices = @transform_1, window_bounds = array<i64: 4096, 128>}, {transform_indices = @transform_2, window_bounds = array<i64: 32, 128>}]} {
    %c0 = arith.constant 0 : index
    %c0_0 = arith.constant 0 : index
    %0 = vector.load %arg1[%c0, %c0_0] : memref<32x4096xf32, #tpu.memory_space<vmem>>, vector<32x4096xf32>
    %c0_1 = arith.constant 0 : index
    %c0_2 = arith.constant 0 : index
    %1 = vector.load %arg2[%c0_1, %c0_2] : memref<4096x128xf32, #tpu.memory_space<vmem>>, vector<4096x128xf32>
    %cst = arith.constant dense<0.000000e+00> : vector<32x128xf32>
    %2 = tpu.matmul %0, %1, %cst {dimension_numbers = #tpu.dot_dimension_numbers<[1], [0], [0], [1], [0, 0, 1, 1], [], []>} : vector<32x4096xf32>, vector<4096x128xf32>, vector<32x128xf32> -> vector<32x128xf32>
    %c0_3 = arith.constant 0 : index
    %c0_4 = arith.constant 0 : index
    %3 = vector.load %arg3[%c0_3, %c0_4] : memref<32x128xf32, #tpu.memory_space<vmem>>, vector<32x128xf32>
    tpu.vector_store %arg3[%c0_3, %c0_4], %2 {strides = array<i32>} : memref<32x128xf32, #tpu.memory_space<vmem>>, vector<32x128xf32>,
    return
  }
  func.func @transform_0(%arg0: i32) -> (i32, i32) {
    %c0_i32 = arith.constant 0 : i32
    %c0_i32_0 = arith.constant 0 : i32
    return %arg0, %c0_i32 : i32, i32
  }
  func.func @transform_1(%arg0: i32) -> (i32, i32) {
    %c0_i32 = arith.constant 0 : i32
    %c0_i32_0 = arith.constant 0 : i32
    %c0_i32_1 = arith.constant 0 : i32
    return %c0_i32, %c0_i32_0 : i32, i32
  }
  func.func @transform_2(%arg0: i32) -> (i32, i32) {
    %c0_i32 = arith.constant 0 : i32
    %c0_i32_0 = arith.constant 0 : i32
    return %arg0, %c0_i32 : i32, i32
  }
}

</mosaic_0001>

<llo_original>
// kernel: tpu_custom_call.1
$region0: #{tpu_custom_call.1}
  #allocation0 [shape = 'u32[]', space=smem, size = 0x4, offset = 0x4, fixed_abs, tag = 'smem constant byte address 0x4 - core index']
  #allocation1 [shape = 'u32[144,128]{1,0:T(1,128)}', space=vmem, size = 0x12000, scoped, tag = 'internal scratch']
  %s0 = inlined_call_operand.hbm [shape: f32[31,4096], index: 0, kind: input, shape index: {}]
  %s1 = inlined_call_operand.hbm [shape: f32[4096,128], index: 1, kind: input, shape index: {}]
  %s2 = inlined_call_operand.hbm [shape: f32[31,128], index: 2, kind: output, shape index: {}]
  %s3 = sld [smem:[#allocation0]]
  $region26: #{tpu_custom_call.1} parent=0
    _
  %s5 = ssub.s32 1, %s3
  %s6 = scalar_select 0, %s5, %s3
  $region1: #{tpu_custom_call.1} parent=0
    #allocation2 [shape = 'u8[524288]{0}', space=vmem, size = 0x80000, scoped, tag = 'input window, operand 0, single buffered']
    #allocation3 [shape = 's32[1]{0}', space=sflag, size = 0x4, scoped, tag = 'scoped memory for tpu_custom_call.1']
    #allocation4 [shape = 's32[1]{0}', space=sflag, size = 0x4, scoped, tag = 'scoped memory for tpu_custom_call.1']
    #allocation5 [shape = 'u8[2097152]{0}', space=vmem, size = 0x200000, scoped, tag = 'input window, operand 1, single buffered']
    #allocation6 [shape = 's32[1]{0}', space=sflag, size = 0x4, scoped, tag = 'scoped memory for tpu_custom_call.1']
    #allocation7 [shape = 'u8[16384]{0}', space=vmem, size = 0x4000, scoped, tag = 'output window, operand 0, single buffered']
    %7 = vsyncpa [#allocation3], 0
    %8 = vsyncpa [#allocation6], 0
    %9 = vsyncpa [#allocation4], 0
    // Predicated region
    $region2: #{tpu_custom_call.1} parent=1 // pred_check
      _
    $region3: #{tpu_custom_call.1} parent=1 // pred_check_branch
      %11 = sbr.rel (0) target = $region5
    $region4: #{tpu_custom_call.1} parent=1 // pred_region
      %s13 = ssub.s32 16384, 16384
      %14 = vsyncadd [#allocation3], %s13
      %s15 = sshll.u32 [#allocation2], 4
      %s16 = int_to_ptr.vmem [resolvable:$true] %s15
      %21 = dma.hbm_to_vmem [thread:$0]  %s0, 16384, %s16, [#allocation3], 4096, 4096, 256
    $region5: #{tpu_custom_call.1} parent=1 // pred_fallthru
      _
    // Predicated region
    $region6: #{tpu_custom_call.1} parent=1 // pred_check
      _
    $region7: #{tpu_custom_call.1} parent=1 // pred_check_branch
      %23 = sbr.rel (0) target = $region9
    $region8: #{tpu_custom_call.1} parent=1 // pred_region
      %s25 = ssub.s32 65536, 65536
      %26 = vsyncadd [#allocation6], %s25
      %s27 = sshll.u32 [#allocation5], 4
      %s28 = int_to_ptr.vmem [resolvable:$true] %s27
      %33 = dma.hbm_to_vmem [thread:$0]  %s1, 65536, %s28, [#allocation6], 128, 128, 8
    $region9: #{tpu_custom_call.1} parent=1 // pred_fallthru
      _
    // Predicated region
    $region10: #{tpu_custom_call.1} parent=1 // pred_check
      _
    $region11: #{tpu_custom_call.1} parent=1 // pred_check_branch
      %35 = sbr.rel (0) target = $region13
    $region12: #{tpu_custom_call.1} parent=1 // pred_region
      %36 = dma.done [#allocation3], 16384
    $region13: #{tpu_custom_call.1} parent=1 // pred_fallthru
      _
    // Predicated region
    $region14: #{tpu_custom_call.1} parent=1 // pred_check
      _
    $region15: #{tpu_custom_call.1} parent=1 // pred_check_branch
      %38 = sbr.rel (0) target = $region17
    $region16: #{tpu_custom_call.1} parent=1 // pred_region
      %39 = dma.done [#allocation6], 65536
    $region17: #{tpu_custom_call.1} parent=1 // pred_fallthru
      _
    %v40 = vld [vmem:[#allocation2] sm:$0xff]
    %v41 = vld [vmem:[#allocation2 + $0x8] sm:$0xff]
    %v42 = vld [vmem:[#allocation2 + $0x10] sm:$0xff]
    %v43 = vld [vmem:[#allocation2 + $0x18] sm:$0xff]
    %v44 = vld [vmem:[#allocation2 + $0x20] sm:$0xff]
    %v45 = vld [vmem:[#allocation2 + $0x28] sm:$0xff]
    %v46 = vld [vmem:[#allocation2 + $0x30] sm:$0xff]
    %v47 = vld [vmem:[#allocation2 + $0x38] sm:$0xff]
    %v48 = vld [vmem:[#allocation2 + $0x40] sm:$0xff]
    %v49 = vld [vmem:[#allocation2 + $0x48] sm:$0xff]
    %v50 = vld [vmem:[#allocation2 + $0x50] sm:$0xff]
    %v51 = vld [vmem:[#allocation2 + $0x58] sm:$0xff]
    %v52 = vld [vmem:[#allocation2 + $0x60] sm:$0xff]
    %v53 = vld [vmem:[#allocation2 + $0x68] sm:$0xff]
    %v54 = vld [vmem:[#allocation2 + $0x70] sm:$0xff]
    %v55 = vld [vmem:[#allocation2 + $0x78] sm:$0xff]
    %v56 = vld [vmem:[#allocation2 + $0x80] sm:$0xff]
    %v57 = vld [vmem:[#allocation2 + $0x88] sm:$0xff]
    %v58 = vld [vmem:[#allocation2 + $0x90] sm:$0xff]
    %v59 = vld [vmem:[#allocation2 + $0x98] sm:$0xff]
    %v60 = vld [vmem:[#allocation2 + $0xa0] sm:$0xff]
    %v61 = vld [vmem:[#allocation2 + $0xa8] sm:$0xff]
    %v62 = vld [vmem:[#allocation2 + $0xb0] sm:$0xff]
    %v63 = vld [vmem:[#allocation2 + $0xb8] sm:$0xff]
    %v64 = vld [vmem:[#allocation2 + $0xc0] sm:$0xff]
    %v65 = vld [vmem:[#allocation2 + $0xc8] sm:$0xff]
    %v66 = vld [vmem:[#allocation2 + $0xd0] sm:$0xff]
    %v67 = vld [vmem:[#allocation2 + $0xd8] sm:$0xff]
    %v68 = vld [vmem:[#allocation2 + $0xe0] sm:$0xff]
    %v69 = vld [vmem:[#allocation2 + $0xe8] sm:$0xff]
    %v70 = vld [vmem:[#allocation2 + $0xf0] sm:$0xff]
    %v71 = vld [vmem:[#allocation2 + $0xf8] sm:$0xff]
    %v72 = vld [vmem:[#allocation2 + $0x100] sm:$0xff]
    %v73 = vld [vmem:[#allocation2 + $0x108] sm:$0xff]
    %v74 = vld [vmem:[#allocation2 + $0x110] sm:$0xff]
    %v75 = vld [vmem:[#allocation2 + $0x118] sm:$0xff]
    %v76 = vld [vmem:[#allocation2 + $0x120] sm:$0xff]
    %v77 = vld [vmem:[#allocation2 + $0x128] sm:$0xff]
    %v78 = vld [vmem:[#allocation2 + $0x130] sm:$0xff]
    %v79 = vld [vmem:[#allocation2 + $0x138] sm:$0xff]
    %v80 = vld [vmem:[#allocation2 + $0x140] sm:$0xff]
    %v81 = vld [vmem:[#allocation2 + $0x148] sm:$0xff]
    %v82 = vld [vmem:[#allocation2 + $0x150] sm:$0xff]
    %v83 = vld [vmem:[#allocation2 + $0x158] sm:$0xff]
    %v84 = vld [vmem:[#allocation2 + $0x160] sm:$0xff]
    %v85 = vld [vmem:[#allocation2 + $0x168] sm:$0xff]
    %v86 = vld [vmem:[#allocation2 + $0x170] sm:$0xff]
    %v87 = vld [vmem:[#allocation2 + $0x178] sm:$0xff]
    %v88 = vld [vmem:[#allocation2 + $0x180] sm:$0xff]
    %v89 = vld [vmem:[#allocation2 + $0x188] sm:$0xff]
    %v90 = vld [vmem:[#allocation2 + $0x190] sm:$0xff]
    %v91 = vld [vmem:[#allocation2 + $0x198] sm:$0xff]
    %v92 = vld [vmem:[#allocation2 + $0x1a0] sm:$0xff]
    %v93 = vld [vmem:[#allocation2 + $0x1a8] sm:$0xff]
    %v94 = vld [vmem:[#allocation2 + $0x1b0] sm:$0xff]
    %v95 = vld [vmem:[#allocation2 + $0x1b8] sm:$0xff]
    %v96 = vld [vmem:[#allocation2 + $0x1c0] sm:$0xff]
    %v97 = vld [vmem:[#allocation2 + $0x1c8] sm:$0xff]
    %v98 = vld [vmem:[#allocation2 + $0x1d0] sm:$0xff]
    %v99 = vld [vmem:[#allocation2 + $0x1d8] sm:$0xff]
    %v100 = vld [vmem:[#allocation2 + $0x1e0] sm:$0xff]
    %v101 = vld [vmem:[#allocation2 + $0x1e8] sm:$0xff]
    %v102 = vld [vmem:[#allocation2 + $0x1f0] sm:$0xff]
    %v103 = vld [vmem:[#allocation2 + $0x1f8] sm:$0xff]
    %v104 = vld [vmem:[#allocation2 + $0x200] sm:$0xff]
    %v105 = vld [vmem:[#allocation2 + $0x208] sm:$0xff]
    %v106 = vld [vmem:[#allocation2 + $0x210] sm:$0xff]
    %v107 = vld [vmem:[#allocation2 + $0x218] sm:$0xff]
    %v108 = vld [vmem:[#allocation2 + $0x220] sm:$0xff]
    %v109 = vld [vmem:[#allocation2 + $0x228] sm:$0xff]
    %v110 = vld [vmem:[#allocation2 + $0x230] sm:$0xff]
    %v111 = vld [vmem:[#allocation2 + $0x238] sm:$0xff]
    %v112 = vld [vmem:[#allocation2 + $0x240] sm:$0xff]
    %v113 = vld [vmem:[#allocation2 + $0x248] sm:$0xff]
    %v114 = vld [vmem:[#allocation2 + $0x250] sm:$0xff]
    %v115 = vld [vmem:[#allocation2 + $0x258] sm:$0xff]
    %v116 = vld [vmem:[#allocation2 + $0x260] sm:$0xff]
    %v117 = vld [vmem:[#allocation2 + $0x268] sm:$0xff]
    %v118 = vld [vmem:[#allocation2 + $0x270] sm:$0xff]
    %v119 = vld [vmem:[#allocation2 + $0x278] sm:$0xff]
    %v120 = vld [vmem:[#allocation2 + $0x280] sm:$0xff]
    %v121 = vld [vmem:[#allocation2 + $0x288] sm:$0xff]
    %v122 = vld [vmem:[#allocation2 + $0x290] sm:$0xff]
    %v123 = vld [vmem:[#allocation2 + $0x298] sm:$0xff]
    %v124 = vld [vmem:[#allocation2 + $0x2a0] sm:$0xff]
    %v125 = vld [vmem:[#allocation2 + $0x2a8] sm:$0xff]
    %v126 = vld [vmem:[#allocation2 + $0x2b0] sm:$0xff]
    %v127 = vld [vmem:[#allocation2 + $0x2b8] sm:$0xff]
    %v128 = vld [vmem:[#allocation2 + $0x2c0] sm:$0xff]
    %v129 = vld [vmem:[#allocation2 + $0x2c8] sm:$0xff]
    %v130 = vld [vmem:[#allocation2 + $0x2d0] sm:$0xff]
    %v131 = vld [vmem:[#allocation2 + $0x2d8] sm:$0xff]
    %v132 = vld [vmem:[#allocation2 + $0x2e0] sm:$0xff]
    %v133 = vld [vmem:[#allocation2 + $0x2e8] sm:$0xff]
    %v134 = vld [vmem:[#allocation2 + $0x2f0] sm:$0xff]
    %v135 = vld [vmem:[#allocation2 + $0x2f8] sm:$0xff]
    %v136 = vld [vmem:[#allocation2 + $0x300] sm:$0xff]
    %v137 = vld [vmem:[#allocation2 + $0x308] sm:$0xff]
    %v138 = vld [vmem:[#allocation2 + $0x310] sm:$0xff]
    %v139 = vld [vmem:[#allocation2 + $0x318] sm:$0xff]
    %v140 = vld [vmem:[#allocation2 + $0x320] sm:$0xff]
    %v141 = vld [vmem:[#allocation2 + $0x328] sm:$0xff]
    %v142 = vld [vmem:[#allocation2 + $0x330] sm:$0xff]
    %v143 = vld [vmem:[#allocation2 + $0x338] sm:$0xff]
    %v144 = vld [vmem:[#allocation2 + $0x340] sm:$0xff]
    %v145 = vld [vmem:[#allocation2 + $0x348] sm:$0xff]
    %v146 = vld [vmem:[#allocation2 + $0x350] sm:$0xff]
    %v147 = vld [vmem:[#allocation2 + $0x358] sm:$0xff]
    %v148 = vld [vmem:[#allocation2 + $0x360] sm:$0xff]
    %v149 = vld [vmem:[#allocation2 + $0x368] sm:$0xff]
    %v150 = vld [vmem:[#allocation2 + $0x370] sm:$0xff]
    %v151 = vld [vmem:[#allocation2 + $0x378] sm:$0xff]
    %v152 = vld [vmem:[#allocation2 + $0x380] sm:$0xff]
    %v153 = vld [vmem:[#allocation2 + $0x388] sm:$0xff]
    %v154 = vld [vmem:[#allocation2 + $0x390] sm:$0xff]
    %v155 = vld [vmem:[#allocation2 + $0x398] sm:$0xff]
    %v156 = vld [vmem:[#allocation2 + $0x3a0] sm:$0xff]
    %v157 = vld [vmem:[#allocation2 + $0x3a8] sm:$0xff]
    %v158 = vld [vmem:[#allocation2 + $0x3b0] sm:$0xff]
    %v159 = vld [vmem:[#allocation2 + $0x3b8] sm:$0xff]
    %v160 = vld [vmem:[#allocation2 + $0x3c0] sm:$0xff]
    %v161 = vld [vmem:[#allocation2 + $0x3c8] sm:$0xff]
    %v162 = vld [vmem:[#allocation2 + $0x3d0] sm:$0xff]
    %v163 = vld [vmem:[#allocation2 + $0x3d8] sm:$0xff]
    %v164 = vld [vmem:[#allocation2 + $0x3e0] sm:$0xff]
    %v165 = vld [vmem:[#allocation2 + $0x3e8] sm:$0xff]
    %v166 = vld [vmem:[#allocation2 + $0x3f0] sm:$0xff]
    %v167 = vld [vmem:[#allocation2 + $0x3f8] sm:$0xff]
    %v168 = vld [vmem:[#allocation5] sm:$0xff]
    %v169 = vld [vmem:[#allocation5 + $0x8] sm:$0xff]
    %v170 = vld [vmem:[#allocation5 + $0x10] sm:$0xff]
    %v171 = vld [vmem:[#allocation5 + $0x18] sm:$0xff]
    %v172 = vld [vmem:[#allocation5 + $0x20] sm:$0xff]
    %v173 = vld [vmem:[#allocation5 + $0x28] sm:$0xff]
    %v174 = vld [vmem:[#allocation5 + $0x30] sm:$0xff]
    %v175 = vld [vmem:[#allocation5 + $0x38] sm:$0xff]
    %v176 = vld [vmem:[#allocation5 + $0x40] sm:$0xff]
    %v177 = vld [vmem:[#allocation5 + $0x48] sm:$0xff]
    %v178 = vld [vmem:[#allocation5 + $0x50] sm:$0xff]
    %v179 = vld [vmem:[#allocation5 + $0x58] sm:$0xff]
    %v180 = vld [vmem:[#allocation5 + $0x60] sm:$0xff]
    %v181 = vld [vmem:[#allocation5 + $0x68] sm:$0xff]
    %v182 = vld [vmem:[#allocation5 + $0x70] sm:$0xff]
    %v183 = vld [vmem:[#allocation5 + $0x78] sm:$0xff]
    %v184 = vld [vmem:[#allocation5 + $0x80] sm:$0xff]
    %v185 = vld [vmem:[#allocation5 + $0x88] sm:$0xff]
    %v186 = vld [vmem:[#allocation5 + $0x90] sm:$0xff]
    %v187 = vld [vmem:[#allocation5 + $0x98] sm:$0xff]
    %v188 = vld [vmem:[#allocation5 + $0xa0] sm:$0xff]
    %v189 = vld [vmem:[#allocation5 + $0xa8] sm:$0xff]
    %v190 = vld [vmem:[#allocation5 + $0xb0] sm:$0xff]
    %v191 = vld [vmem:[#allocation5 + $0xb8] sm:$0xff]
    %v192 = vld [vmem:[#allocation5 + $0xc0] sm:$0xff]
    %v193 = vld [vmem:[#allocation5 + $0xc8] sm:$0xff]
    %v194 = vld [vmem:[#allocation5 + $0xd0] sm:$0xff]
    %v195 = vld [vmem:[#allocation5 + $0xd8] sm:$0xff]
    %v196 = vld [vmem:[#allocation5 + $0xe0] sm:$0xff]
    %v197 = vld [vmem:[#allocation5 + $0xe8] sm:$0xff]
    %v198 = vld [vmem:[#allocation5 + $0xf0] sm:$0xff]
    %v199 = vld [vmem:[#allocation5 + $0xf8] sm:$0xff]
    %v200 = vld [vmem:[#allocation5 + $0x100] sm:$0xff]
    %v201 = vld [vmem:[#allocation5 + $0x108] sm:$0xff]
    %v202 = vld [vmem:[#allocation5 + $0x110] sm:$0xff]
    %v203 = vld [vmem:[#allocation5 + $0x118] sm:$0xff]
    %v204 = vld [vmem:[#allocation5 + $0x120] sm:$0xff]
    %v205 = vld [vmem:[#allocation5 + $0x128] sm:$0xff]
    %v206 = vld [vmem:[#allocation5 + $0x130] sm:$0xff]
    %v207 = vld [vmem:[#allocation5 + $0x138] sm:$0xff]
    %v208 = vld [vmem:[#allocation5 + $0x140] sm:$0xff]
    %v209 = vld [vmem:[#allocation5 + $0x148] sm:$0xff]
    %v210 = vld [vmem:[#allocation5 + $0x150] sm:$0xff]
    %v211 = vld [vmem:[#allocation5 + $0x158] sm:$0xff]
    %v212 = vld [vmem:[#allocation5 + $0x160] sm:$0xff]
    %v213 = vld [vmem:[#allocation5 + $0x168] sm:$0xff]
    %v214 = vld [vmem:[#allocation5 + $0x170] sm:$0xff]
    %v215 = vld [vmem:[#allocation5 + $0x178] sm:$0xff]
    %v216 = vld [vmem:[#allocation5 + $0x180] sm:$0xff]
    %v217 = vld [vmem:[#allocation5 + $0x188] sm:$0xff]
    %v218 = vld [vmem:[#allocation5 + $0x190] sm:$0xff]
    %v219 = vld [vmem:[#allocation5 + $0x198] sm:$0xff]
    %v220 = vld [vmem:[#allocation5 + $0x1a0] sm:$0xff]
    %v221 = vld [vmem:[#allocation5 + $0x1a8] sm:$0xff]
    %v222 = vld [vmem:[#allocation5 + $0x1b0] sm:$0xff]
    %v223 = vld [vmem:[#allocation5 + $0x1b8] sm:$0xff]
    %v224 = vld [vmem:[#allocation5 + $0x1c0] sm:$0xff]
    %v225 = vld [vmem:[#allocation5 + $0x1c8] sm:$0xff]
    %v226 = vld [vmem:[#allocation5 + $0x1d0] sm:$0xff]
    %v227 = vld [vmem:[#allocation5 + $0x1d8] sm:$0xff]
    %v228 = vld [vmem:[#allocation5 + $0x1e0] sm:$0xff]
    %v229 = vld [vmem:[#allocation5 + $0x1e8] sm:$0xff]
    %v230 = vld [vmem:[#allocation5 + $0x1f0] sm:$0xff]
    %v231 = vld [vmem:[#allocation5 + $0x1f8] sm:$0xff]
    %v232 = vld [vmem:[#allocation5 + $0x200] sm:$0xff]
    %v233 = vld [vmem:[#allocation5 + $0x208] sm:$0xff]
    %v234 = vld [vmem:[#allocation5 + $0x210] sm:$0xff]
    %v235 = vld [vmem:[#allocation5 + $0x218] sm:$0xff]
    %v236 = vld [vmem:[#allocation5 + $0x220] sm:$0xff]
    %v237 = vld [vmem:[#allocation5 + $0x228] sm:$0xff]
    %v238 = vld [vmem:[#allocation5 + $0x230] sm:$0xff]
    %v239 = vld [vmem:[#allocation5 + $0x238] sm:$0xff]
    %v240 = vld [vmem:[#allocation5 + $0x240] sm:$0xff]
    %v241 = vld [vmem:[#allocation5 + $0x248] sm:$0xff]
    %v242 = vld [vmem:[#allocation5 + $0x250] sm:$0xff]
    %v243 = vld [vmem:[#allocation5 + $0x258] sm:$0xff]
    %v244 = vld [vmem:[#allocation5 + $0x260] sm:$0xff]
    %v245 = vld [vmem:[#allocation5 + $0x268] sm:$0xff]
    %v246 = vld [vmem:[#allocation5 + $0x270] sm:$0xff]
    %v247 = vld [vmem:[#allocation5 + $0x278] sm:$0xff]
    %v248 = vld [vmem:[#allocation5 + $0x280] sm:$0xff]
    %v249 = vld [vmem:[#allocation5 + $0x288] sm:$0xff]
    %v250 = vld [vmem:[#allocation5 + $0x290] sm:$0xff]
    %v251 = vld [vmem:[#allocation5 + $0x298] sm:$0xff]
    %v252 = vld [vmem:[#allocation5 + $0x2a0] sm:$0xff]
    %v253 = vld [vmem:[#allocation5 + $0x2a8] sm:$0xff]
    %v254 = vld [vmem:[#allocation5 + $0x2b0] sm:$0xff]
    %v255 = vld [vmem:[#allocation5 + $0x2b8] sm:$0xff]
    %v256 = vld [vmem:[#allocation5 + $0x2c0] sm:$0xff]
    %v257 = vld [vmem:[#allocation5 + $0x2c8] sm:$0xff]
    %v258 = vld [vmem:[#allocation5 + $0x2d0] sm:$0xff]
    %v259 = vld [vmem:[#allocation5 + $0x2d8] sm:$0xff]
    %v260 = vld [vmem:[#allocation5 + $0x2e0] sm:$0xff]
    %v261 = vld [vmem:[#allocation5 + $0x2e8] sm:$0xff]
    %v262 = vld [vmem:[#allocation5 + $0x2f0] sm:$0xff]
    %v263 = vld [vmem:[#allocation5 + $0x2f8] sm:$0xff]
    %v264 = vld [vmem:[#allocation5 + $0x300] sm:$0xff]
    %v265 = vld [vmem:[#allocation5 + $0x308] sm:$0xff]
    %v266 = vld [vmem:[#allocation5 + $0x310] sm:$0xff]
    %v267 = vld [vmem:[#allocation5 + $0x318] sm:$0xff]
    %v268 = vld [vmem:[#allocation5 + $0x320] sm:$0xff]
    %v269 = vld [vmem:[#allocation5 + $0x328] sm:$0xff]
    %v270 = vld [vmem:[#allocation5 + $0x330] sm:$0xff]
    %v271 = vld [vmem:[#allocation5 + $0x338] sm:$0xff]
    %v272 = vld [vmem:[#allocation5 + $0x340] sm:$0xff]
    %v273 = vld [vmem:[#allocation5 + $0x348] sm:$0xff]
    %v274 = vld [vmem:[#allocation5 + $0x350] sm:$0xff]
    %v275 = vld [vmem:[#allocation5 + $0x358] sm:$0xff]
    %v276 = vld [vmem:[#allocation5 + $0x360] sm:$0xff]
    %v277 = vld [vmem:[#allocation5 + $0x368] sm:$0xff]
    %v278 = vld [vmem:[#allocation5 + $0x370] sm:$0xff]
    %v279 = vld [vmem:[#allocation5 + $0x378] sm:$0xff]
    %v280 = vld [vmem:[#allocation5 + $0x380] sm:$0xff]
    %v281 = vld [vmem:[#allocation5 + $0x388] sm:$0xff]
    %v282 = vld [vmem:[#allocation5 + $0x390] sm:$0xff]
    %v283 = vld [vmem:[#allocation5 + $0x398] sm:$0xff]
    %v284 = vld [vmem:[#allocation5 + $0x3a0] sm:$0xff]
    %v285 = vld [vmem:[#allocation5 + $0x3a8] sm:$0xff]
    %v286 = vld [vmem:[#allocation5 + $0x3b0] sm:$0xff]
    %v287 = vld [vmem:[#allocation5 + $0x3b8] sm:$0xff]
    %v288 = vld [vmem:[#allocation5 + $0x3c0] sm:$0xff]
    %v289 = vld [vmem:[#allocation5 + $0x3c8] sm:$0xff]
    %v290 = vld [vmem:[#allocation5 + $0x3d0] sm:$0xff]
    %v291 = vld [vmem:[#allocation5 + $0x3d8] sm:$0xff]
    %v292 = vld [vmem:[#allocation5 + $0x3e0] sm:$0xff]
    %v293 = vld [vmem:[#allocation5 + $0x3e8] sm:$0xff]
    %v294 = vld [vmem:[#allocation5 + $0x3f0] sm:$0xff]
    %v295 = vld [vmem:[#allocation5 + $0x3f8] sm:$0xff]
    %v296 = vld [vmem:[#allocation5 + $0x400] sm:$0xff]
    %v297 = vld [vmem:[#allocation5 + $0x408] sm:$0xff]
    %v298 = vld [vmem:[#allocation5 + $0x410] sm:$0xff]
    %v299 = vld [vmem:[#allocation5 + $0x418] sm:$0xff]
    %v300 = vld [vmem:[#allocation5 + $0x420] sm:$0xff]
    %v301 = vld [vmem:[#allocation5 + $0x428] sm:$0xff]
    %v302 = vld [vmem:[#allocation5 + $0x430] sm:$0xff]
    %v303 = vld [vmem:[#allocation5 + $0x438] sm:$0xff]
    %v304 = vld [vmem:[#allocation5 + $0x440] sm:$0xff]
    %v305 = vld [vmem:[#allocation5 + $0x448] sm:$0xff]
    %v306 = vld [vmem:[#allocation5 + $0x450] sm:$0xff]
    %v307 = vld [vmem:[#allocation5 + $0x458] sm:$0xff]
    %v308 = vld [vmem:[#allocation5 + $0x460] sm:$0xff]
    %v309 = vld [vmem:[#allocation5 + $0x468] sm:$0xff]
    %v310 = vld [vmem:[#allocation5 + $0x470] sm:$0xff]
    %v311 = vld [vmem:[#allocation5 + $0x478] sm:$0xff]
    %v312 = vld [vmem:[#allocation5 + $0x480] sm:$0xff]
    %v313 = vld [vmem:[#allocation5 + $0x488] sm:$0xff]
    %v314 = vld [vmem:[#allocation5 + $0x490] sm:$0xff]
    %v315 = vld [vmem:[#allocation5 + $0x498] sm:$0xff]
    %v316 = vld [vmem:[#allocation5 + $0x4a0] sm:$0xff]
    %v317 = vld [vmem:[#allocation5 + $0x4a8] sm:$0xff]
    %v318 = vld [vmem:[#allocation5 + $0x4b0] sm:$0xff]
    %v319 = vld [vmem:[#allocation5 + $0x4b8] sm:$0xff]
    %v320 = vld [vmem:[#allocation5 + $0x4c0] sm:$0xff]
    %v321 = vld [vmem:[#allocation5 + $0x4c8] sm:$0xff]
    %v322 = vld [vmem:[#allocation5 + $0x4d0] sm:$0xff]
    %v323 = vld [vmem:[#allocation5 + $0x4d8] sm:$0xff]
    %v324 = vld [vmem:[#allocation5 + $0x4e0] sm:$0xff]
    %v325 = vld [vmem:[#allocation5 + $0x4e8] sm:$0xff]
    %v326 = vld [vmem:[#allocation5 + $0x4f0] sm:$0xff]
    %v327 = vld [vmem:[#allocation5 + $0x4f8] sm:$0xff]
    %v328 = vld [vmem:[#allocation5 + $0x500] sm:$0xff]
    %v329 = vld [vmem:[#allocation5 + $0x508] sm:$0xff]
    %v330 = vld [vmem:[#allocation5 + $0x510] sm:$0xff]
    %v331 = vld [vmem:[#allocation5 + $0x518] sm:$0xff]
    %v332 = vld [vmem:[#allocation5 + $0x520] sm:$0xff]
    %v333 = vld [vmem:[#allocation5 + $0x528] sm:$0xff]
    %v334 = vld [vmem:[#allocation5 + $0x530] sm:$0xff]
    %v335 = vld [vmem:[#allocation5 + $0x538] sm:$0xff]
    %v336 = vld [vmem:[#allocation5 + $0x540] sm:$0xff]
    %v337 = vld [vmem:[#allocation5 + $0x548] sm:$0xff]
    %v338 = vld [vmem:[#allocation5 + $0x550] sm:$0xff]
    %v339 = vld [vmem:[#allocation5 + $0x558] sm:$0xff]
    %v340 = vld [vmem:[#allocation5 + $0x560] sm:$0xff]
    %v341 = vld [vmem:[#allocation5 + $0x568] sm:$0xff]
    %v342 = vld [vmem:[#allocation5 + $0x570] sm:$0xff]
    %v343 = vld [vmem:[#allocation5 + $0x578] sm:$0xff]
    %v344 = vld [vmem:[#allocation5 + $0x580] sm:$0xff]
    %v345 = vld [vmem:[#allocation5 + $0x588] sm:$0xff]
    %v346 = vld [vmem:[#allocation5 + $0x590] sm:$0xff]
    %v347 = vld [vmem:[#allocation5 + $0x598] sm:$0xff]
    %v348 = vld [vmem:[#allocation5 + $0x5a0] sm:$0xff]
    %v349 = vld [vmem:[#allocation5 + $0x5a8] sm:$0xff]
    %v350 = vld [vmem:[#allocation5 + $0x5b0] sm:$0xff]
    %v351 = vld [vmem:[#allocation5 + $0x5b8] sm:$0xff]
    %v352 = vld [vmem:[#allocation5 + $0x5c0] sm:$0xff]
    %v353 = vld [vmem:[#allocation5 + $0x5c8] sm:$0xff]
    %v354 = vld [vmem:[#allocation5 + $0x5d0] sm:$0xff]
    %v355 = vld [vmem:[#allocation5 + $0x5d8] sm:$0xff]
    %v356 = vld [vmem:[#allocation5 + $0x5e0] sm:$0xff]
    %v357 = vld [vmem:[#allocation5 + $0x5e8] sm:$0xff]
    %v358 = vld [vmem:[#allocation5 + $0x5f0] sm:$0xff]
    %v359 = vld [vmem:[#allocation5 + $0x5f8] sm:$0xff]
    %v360 = vld [vmem:[#allocation5 + $0x600] sm:$0xff]
    %v361 = vld [vmem:[#allocation5 + $0x608] sm:$0xff]
    %v362 = vld [vmem:[#allocation5 + $0x610] sm:$0xff]
    %v363 = vld [vmem:[#allocation5 + $0x618] sm:$0xff]
    %v364 = vld [vmem:[#allocation5 + $0x620] sm:$0xff]
    %v365 = vld [vmem:[#allocation5 + $0x628] sm:$0xff]
    %v366 = vld [vmem:[#allocation5 + $0x630] sm:$0xff]
    %v367 = vld [vmem:[#allocation5 + $0x638] sm:$0xff]
    %v368 = vld [vmem:[#allocation5 + $0x640] sm:$0xff]
    %v369 = vld [vmem:[#allocation5 + $0x648] sm:$0xff]
    %v370 = vld [vmem:[#allocation5 + $0x650] sm:$0xff]
    %v371 = vld [vmem:[#allocation5 + $0x658] sm:$0xff]
    %v372 = vld [vmem:[#allocation5 + $0x660] sm:$0xff]
    %v373 = vld [vmem:[#allocation5 + $0x668] sm:$0xff]
    %v374 = vld [vmem:[#allocation5 + $0x670] sm:$0xff]
    %v375 = vld [vmem:[#allocation5 + $0x678] sm:$0xff]
    %v376 = vld [vmem:[#allocation5 + $0x680] sm:$0xff]
    %v377 = vld [vmem:[#allocation5 + $0x688] sm:$0xff]
    %v378 = vld [vmem:[#allocation5 + $0x690] sm:$0xff]
    %v379 = vld [vmem:[#allocation5 + $0x698] sm:$0xff]
    %v380 = vld [vmem:[#allocation5 + $0x6a0] sm:$0xff]
    %v381 = vld [vmem:[#allocation5 + $0x6a8] sm:$0xff]
    %v382 = vld [vmem:[#allocation5 + $0x6b0] sm:$0xff]
    %v383 = vld [vmem:[#allocation5 + $0x6b8] sm:$0xff]
    %v384 = vld [vmem:[#allocation5 + $0x6c0] sm:$0xff]
    %v385 = vld [vmem:[#allocation5 + $0x6c8] sm:$0xff]
    %v386 = vld [vmem:[#allocation5 + $0x6d0] sm:$0xff]
    %v387 = vld [vmem:[#allocation5 + $0x6d8] sm:$0xff]
    %v388 = vld [vmem:[#allocation5 + $0x6e0] sm:$0xff]
    %v389 = vld [vmem:[#allocation5 + $0x6e8] sm:$0xff]
    %v390 = vld [vmem:[#allocation5 + $0x6f0] sm:$0xff]
    %v391 = vld [vmem:[#allocation5 + $0x6f8] sm:$0xff]
    %v392 = vld [vmem:[#allocation5 + $0x700] sm:$0xff]
    %v393 = vld [vmem:[#allocation5 + $0x708] sm:$0xff]
    %v394 = vld [vmem:[#allocation5 + $0x710] sm:$0xff]
    %v395 = vld [vmem:[#allocation5 + $0x718] sm:$0xff]
    %v396 = vld [vmem:[#allocation5 + $0x720] sm:$0xff]
    %v397 = vld [vmem:[#allocation5 + $0x728] sm:$0xff]
    %v398 = vld [vmem:[#allocation5 + $0x730] sm:$0xff]
    %v399 = vld [vmem:[#allocation5 + $0x738] sm:$0xff]
    %v400 = vld [vmem:[#allocation5 + $0x740] sm:$0xff]
    %v401 = vld [vmem:[#allocation5 + $0x748] sm:$0xff]
    %v402 = vld [vmem:[#allocation5 + $0x750] sm:$0xff]
    %v403 = vld [vmem:[#allocation5 + $0x758] sm:$0xff]
    %v404 = vld [vmem:[#allocation5 + $0x760] sm:$0xff]
    %v405 = vld [vmem:[#allocation5 + $0x768] sm:$0xff]
    %v406 = vld [vmem:[#allocation5 + $0x770] sm:$0xff]
    %v407 = vld [vmem:[#allocation5 + $0x778] sm:$0xff]
    %v408 = vld [vmem:[#allocation5 + $0x780] sm:$0xff]
    %v409 = vld [vmem:[#allocation5 + $0x788] sm:$0xff]
    %v410 = vld [vmem:[#allocation5 + $0x790] sm:$0xff]
    %v411 = vld [vmem:[#allocation5 + $0x798] sm:$0xff]
    %v412 = vld [vmem:[#allocation5 + $0x7a0] sm:$0xff]
    %v413 = vld [vmem:[#allocation5 + $0x7a8] sm:$0xff]
    %v414 = vld [vmem:[#allocation5 + $0x7b0] sm:$0xff]
    %v415 = vld [vmem:[#allocation5 + $0x7b8] sm:$0xff]
    %v416 = vld [vmem:[#allocation5 + $0x7c0] sm:$0xff]
    %v417 = vld [vmem:[#allocation5 + $0x7c8] sm:$0xff]
    %v418 = vld [vmem:[#allocation5 + $0x7d0] sm:$0xff]
    %v419 = vld [vmem:[#allocation5 + $0x7d8] sm:$0xff]
    %v420 = vld [vmem:[#allocation5 + $0x7e0] sm:$0xff]
    %v421 = vld [vmem:[#allocation5 + $0x7e8] sm:$0xff]
    %v422 = vld [vmem:[#allocation5 + $0x7f0] sm:$0xff]
    %v423 = vld [vmem:[#allocation5 + $0x7f8] sm:$0xff]
    %v424 = vld [vmem:[#allocation5 + $0x800] sm:$0xff]
    %v425 = vld [vmem:[#allocation5 + $0x808] sm:$0xff]
    %v426 = vld [vmem:[#allocation5 + $0x810] sm:$0xff]
    %v427 = vld [vmem:[#allocation5 + $0x818] sm:$0xff]
    %v428 = vld [vmem:[#allocation5 + $0x820] sm:$0xff]
    %v429 = vld [vmem:[#allocation5 + $0x828] sm:$0xff]
    %v430 = vld [vmem:[#allocation5 + $0x830] sm:$0xff]
    %v431 = vld [vmem:[#allocation5 + $0x838] sm:$0xff]
    %v432 = vld [vmem:[#allocation5 + $0x840] sm:$0xff]
    %v433 = vld [vmem:[#allocation5 + $0x848] sm:$0xff]
    %v434 = vld [vmem:[#allocation5 + $0x850] sm:$0xff]
    %v435 = vld [vmem:[#allocation5 + $0x858] sm:$0xff]
    %v436 = vld [vmem:[#allocation5 + $0x860] sm:$0xff]
    %v437 = vld [vmem:[#allocation5 + $0x868] sm:$0xff]
    %v438 = vld [vmem:[#allocation5 + $0x870] sm:$0xff]
    %v439 = vld [vmem:[#allocation5 + $0x878] sm:$0xff]
    %v440 = vld [vmem:[#allocation5 + $0x880] sm:$0xff]
    %v441 = vld [vmem:[#allocation5 + $0x888] sm:$0xff]
    %v442 = vld [vmem:[#allocation5 + $0x890] sm:$0xff]
    %v443 = vld [vmem:[#allocation5 + $0x898] sm:$0xff]
    %v444 = vld [vmem:[#allocation5 + $0x8a0] sm:$0xff]
    %v445 = vld [vmem:[#allocation5 + $0x8a8] sm:$0xff]
    %v446 = vld [vmem:[#allocation5 + $0x8b0] sm:$0xff]
    %v447 = vld [vmem:[#allocation5 + $0x8b8] sm:$0xff]
    %v448 = vld [vmem:[#allocation5 + $0x8c0] sm:$0xff]
    %v449 = vld [vmem:[#allocation5 + $0x8c8] sm:$0xff]
    %v450 = vld [vmem:[#allocation5 + $0x8d0] sm:$0xff]
    %v451 = vld [vmem:[#allocation5 + $0x8d8] sm:$0xff]
    %v452 = vld [vmem:[#allocation5 + $0x8e0] sm:$0xff]
    %v453 = vld [vmem:[#allocation5 + $0x8e8] sm:$0xff]
    %v454 = vld [vmem:[#allocation5 + $0x8f0] sm:$0xff]
    %v455 = vld [vmem:[#allocation5 + $0x8f8] sm:$0xff]
    %v456 = vld [vmem:[#allocation5 + $0x900] sm:$0xff]
    %v457 = vld [vmem:[#allocation5 + $0x908] sm:$0xff]
    %v458 = vld [vmem:[#allocation5 + $0x910] sm:$0xff]
    %v459 = vld [vmem:[#allocation5 + $0x918] sm:$0xff]
    %v460 = vld [vmem:[#allocation5 + $0x920] sm:$0xff]
    %v461 = vld [vmem:[#allocation5 + $0x928] sm:$0xff]
    %v462 = vld [vmem:[#allocation5 + $0x930] sm:$0xff]
    %v463 = vld [vmem:[#allocation5 + $0x938] sm:$0xff]
    %v464 = vld [vmem:[#allocation5 + $0x940] sm:$0xff]
    %v465 = vld [vmem:[#allocation5 + $0x948] sm:$0xff]
    %v466 = vld [vmem:[#allocation5 + $0x950] sm:$0xff]
    %v467 = vld [vmem:[#allocation5 + $0x958] sm:$0xff]
    %v468 = vld [vmem:[#allocation5 + $0x960] sm:$0xff]
    %v469 = vld [vmem:[#allocation5 + $0x968] sm:$0xff]
    %v470 = vld [vmem:[#allocation5 + $0x970] sm:$0xff]
    %v471 = vld [vmem:[#allocation5 + $0x978] sm:$0xff]
    %v472 = vld [vmem:[#allocation5 + $0x980] sm:$0xff]
    %v473 = vld [vmem:[#allocation5 + $0x988] sm:$0xff]
    %v474 = vld [vmem:[#allocation5 + $0x990] sm:$0xff]
    %v475 = vld [vmem:[#allocation5 + $0x998] sm:$0xff]
    %v476 = vld [vmem:[#allocation5 + $0x9a0] sm:$0xff]
    %v477 = vld [vmem:[#allocation5 + $0x9a8] sm:$0xff]
    %v478 = vld [vmem:[#allocation5 + $0x9b0] sm:$0xff]
    %v479 = vld [vmem:[#allocation5 + $0x9b8] sm:$0xff]
    %v480 = vld [vmem:[#allocation5 + $0x9c0] sm:$0xff]
    %v481 = vld [vmem:[#allocation5 + $0x9c8] sm:$0xff]
    %v482 = vld [vmem:[#allocation5 + $0x9d0] sm:$0xff]
    %v483 = vld [vmem:[#allocation5 + $0x9d8] sm:$0xff]
    %v484 = vld [vmem:[#allocation5 + $0x9e0] sm:$0xff]
    %v485 = vld [vmem:[#allocation5 + $0x9e8] sm:$0xff]
    %v486 = vld [vmem:[#allocation5 + $0x9f0] sm:$0xff]
    %v487 = vld [vmem:[#allocation5 + $0x9f8] sm:$0xff]
    %v488 = vld [vmem:[#allocation5 + $0xa00] sm:$0xff]
    %v489 = vld [vmem:[#allocation5 + $0xa08] sm:$0xff]
    %v490 = vld [vmem:[#allocation5 + $0xa10] sm:$0xff]
    %v491 = vld [vmem:[#allocation5 + $0xa18] sm:$0xff]
    %v492 = vld [vmem:[#allocation5 + $0xa20] sm:$0xff]
    %v493 = vld [vmem:[#allocation5 + $0xa28] sm:$0xff]
    %v494 = vld [vmem:[#allocation5 + $0xa30] sm:$0xff]
    %v495 = vld [vmem:[#allocation5 + $0xa38] sm:$0xff]
    %v496 = vld [vmem:[#allocation5 + $0xa40] sm:$0xff]
    %v497 = vld [vmem:[#allocation5 + $0xa48] sm:$0xff]
    %v498 = vld [vmem:[#allocation5 + $0xa50] sm:$0xff]
    %v499 = vld [vmem:[#allocation5 + $0xa58] sm:$0xff]
    %v500 = vld [vmem:[#allocation5 + $0xa60] sm:$0xff]
    %v501 = vld [vmem:[#allocation5 + $0xa68] sm:$0xff]
    %v502 = vld [vmem:[#allocation5 + $0xa70] sm:$0xff]
    %v503 = vld [vmem:[#allocation5 + $0xa78] sm:$0xff]
    %v504 = vld [vmem:[#allocation5 + $0xa80] sm:$0xff]
    %v505 = vld [vmem:[#allocation5 + $0xa88] sm:$0xff]
    %v506 = vld [vmem:[#allocation5 + $0xa90] sm:$0xff]
    %v507 = vld [vmem:[#allocation5 + $0xa98] sm:$0xff]
    %v508 = vld [vmem:[#allocation5 + $0xaa0] sm:$0xff]
    %v509 = vld [vmem:[#allocation5 + $0xaa8] sm:$0xff]
    %v510 = vld [vmem:[#allocation5 + $0xab0] sm:$0xff]
    %v511 = vld [vmem:[#allocation5 + $0xab8] sm:$0xff]
    %v512 = vld [vmem:[#allocation5 + $0xac0] sm:$0xff]
    %v513 = vld [vmem:[#allocation5 + $0xac8] sm:$0xff]
    %v514 = vld [vmem:[#allocation5 + $0xad0] sm:$0xff]
    %v515 = vld [vmem:[#allocation5 + $0xad8] sm:$0xff]
    %v516 = vld [vmem:[#allocation5 + $0xae0] sm:$0xff]
    %v517 = vld [vmem:[#allocation5 + $0xae8] sm:$0xff]
    %v518 = vld [vmem:[#allocation5 + $0xaf0] sm:$0xff]
    %v519 = vld [vmem:[#allocation5 + $0xaf8] sm:$0xff]
    %v520 = vld [vmem:[#allocation5 + $0xb00] sm:$0xff]
    %v521 = vld [vmem:[#allocation5 + $0xb08] sm:$0xff]
    %v522 = vld [vmem:[#allocation5 + $0xb10] sm:$0xff]
    %v523 = vld [vmem:[#allocation5 + $0xb18] sm:$0xff]
    %v524 = vld [vmem:[#allocation5 + $0xb20] sm:$0xff]
    %v525 = vld [vmem:[#allocation5 + $0xb28] sm:$0xff]
    %v526 = vld [vmem:[#allocation5 + $0xb30] sm:$0xff]
    %v527 = vld [vmem:[#allocation5 + $0xb38] sm:$0xff]
    %v528 = vld [vmem:[#allocation5 + $0xb40] sm:$0xff]
    %v529 = vld [vmem:[#allocation5 + $0xb48] sm:$0xff]
    %v530 = vld [vmem:[#allocation5 + $0xb50] sm:$0xff]
    %v531 = vld [vmem:[#allocation5 + $0xb58] sm:$0xff]
    %v532 = vld [vmem:[#allocation5 + $0xb60] sm:$0xff]
    %v533 = vld [vmem:[#allocation5 + $0xb68] sm:$0xff]
    %v534 = vld [vmem:[#allocation5 + $0xb70] sm:$0xff]
    %v535 = vld [vmem:[#allocation5 + $0xb78] sm:$0xff]
    %v536 = vld [vmem:[#allocation5 + $0xb80] sm:$0xff]
    %v537 = vld [vmem:[#allocation5 + $0xb88] sm:$0xff]
    %v538 = vld [vmem:[#allocation5 + $0xb90] sm:$0xff]
    %v539 = vld [vmem:[#allocation5 + $0xb98] sm:$0xff]
    %v540 = vld [vmem:[#allocation5 + $0xba0] sm:$0xff]
    %v541 = vld [vmem:[#allocation5 + $0xba8] sm:$0xff]
    %v542 = vld [vmem:[#allocation5 + $0xbb0] sm:$0xff]
    %v543 = vld [vmem:[#allocation5 + $0xbb8] sm:$0xff]
    %v544 = vld [vmem:[#allocation5 + $0xbc0] sm:$0xff]
    %v545 = vld [vmem:[#allocation5 + $0xbc8] sm:$0xff]
    %v546 = vld [vmem:[#allocation5 + $0xbd0] sm:$0xff]
    %v547 = vld [vmem:[#allocation5 + $0xbd8] sm:$0xff]
    %v548 = vld [vmem:[#allocation5 + $0xbe0] sm:$0xff]
    %v549 = vld [vmem:[#allocation5 + $0xbe8] sm:$0xff]
    %v550 = vld [vmem:[#allocation5 + $0xbf0] sm:$0xff]
    %v551 = vld [vmem:[#allocation5 + $0xbf8] sm:$0xff]
    %v552 = vld [vmem:[#allocation5 + $0xc00] sm:$0xff]
    %v553 = vld [vmem:[#allocation5 + $0xc08] sm:$0xff]
    %v554 = vld [vmem:[#allocation5 + $0xc10] sm:$0xff]
    %v555 = vld [vmem:[#allocation5 + $0xc18] sm:$0xff]
    %v556 = vld [vmem:[#allocation5 + $0xc20] sm:$0xff]
    %v557 = vld [vmem:[#allocation5 + $0xc28] sm:$0xff]
    %v558 = vld [vmem:[#allocation5 + $0xc30] sm:$0xff]
    %v559 = vld [vmem:[#allocation5 + $0xc38] sm:$0xff]
    %v560 = vld [vmem:[#allocation5 + $0xc40] sm:$0xff]
    %v561 = vld [vmem:[#allocation5 + $0xc48] sm:$0xff]
    %v562 = vld [vmem:[#allocation5 + $0xc50] sm:$0xff]
    %v563 = vld [vmem:[#allocation5 + $0xc58] sm:$0xff]
    %v564 = vld [vmem:[#allocation5 + $0xc60] sm:$0xff]
    %v565 = vld [vmem:[#allocation5 + $0xc68] sm:$0xff]
    %v566 = vld [vmem:[#allocation5 + $0xc70] sm:$0xff]
    %v567 = vld [vmem:[#allocation5 + $0xc78] sm:$0xff]
    %v568 = vld [vmem:[#allocation5 + $0xc80] sm:$0xff]
    %v569 = vld [vmem:[#allocation5 + $0xc88] sm:$0xff]
    %v570 = vld [vmem:[#allocation5 + $0xc90] sm:$0xff]
    %v571 = vld [vmem:[#allocation5 + $0xc98] sm:$0xff]
    %v572 = vld [vmem:[#allocation5 + $0xca0] sm:$0xff]
    %v573 = vld [vmem:[#allocation5 + $0xca8] sm:$0xff]
    %v574 = vld [vmem:[#allocation5 + $0xcb0] sm:$0xff]
    %v575 = vld [vmem:[#allocation5 + $0xcb8] sm:$0xff]
    %v576 = vld [vmem:[#allocation5 + $0xcc0] sm:$0xff]
    %v577 = vld [vmem:[#allocation5 + $0xcc8] sm:$0xff]
    %v578 = vld [vmem:[#allocation5 + $0xcd0] sm:$0xff]
    %v579 = vld [vmem:[#allocation5 + $0xcd8] sm:$0xff]
    %v580 = vld [vmem:[#allocation5 + $0xce0] sm:$0xff]
    %v581 = vld [vmem:[#allocation5 + $0xce8] sm:$0xff]
    %v582 = vld [vmem:[#allocation5 + $0xcf0] sm:$0xff]
    %v583 = vld [vmem:[#allocation5 + $0xcf8] sm:$0xff]
    %v584 = vld [vmem:[#allocation5 + $0xd00] sm:$0xff]
    %v585 = vld [vmem:[#allocation5 + $0xd08] sm:$0xff]
    %v586 = vld [vmem:[#allocation5 + $0xd10] sm:$0xff]
    %v587 = vld [vmem:[#allocation5 + $0xd18] sm:$0xff]
    %v588 = vld [vmem:[#allocation5 + $0xd20] sm:$0xff]
    %v589 = vld [vmem:[#allocation5 + $0xd28] sm:$0xff]
    %v590 = vld [vmem:[#allocation5 + $0xd30] sm:$0xff]
    %v591 = vld [vmem:[#allocation5 + $0xd38] sm:$0xff]
    %v592 = vld [vmem:[#allocation5 + $0xd40] sm:$0xff]
    %v593 = vld [vmem:[#allocation5 + $0xd48] sm:$0xff]
    %v594 = vld [vmem:[#allocation5 + $0xd50] sm:$0xff]
    %v595 = vld [vmem:[#allocation5 + $0xd58] sm:$0xff]
    %v596 = vld [vmem:[#allocation5 + $0xd60] sm:$0xff]
    %v597 = vld [vmem:[#allocation5 + $0xd68] sm:$0xff]
    %v598 = vld [vmem:[#allocation5 + $0xd70] sm:$0xff]
    %v599 = vld [vmem:[#allocation5 + $0xd78] sm:$0xff]
    %v600 = vld [vmem:[#allocation5 + $0xd80] sm:$0xff]
    %v601 = vld [vmem:[#allocation5 + $0xd88] sm:$0xff]
    %v602 = vld [vmem:[#allocation5 + $0xd90] sm:$0xff]
    %v603 = vld [vmem:[#allocation5 + $0xd98] sm:$0xff]
    %v604 = vld [vmem:[#allocation5 + $0xda0] sm:$0xff]
    %v605 = vld [vmem:[#allocation5 + $0xda8] sm:$0xff]
    %v606 = vld [vmem:[#allocation5 + $0xdb0] sm:$0xff]
    %v607 = vld [vmem:[#allocation5 + $0xdb8] sm:$0xff]
    %v608 = vld [vmem:[#allocation5 + $0xdc0] sm:$0xff]
    %v609 = vld [vmem:[#allocation5 + $0xdc8] sm:$0xff]
    %v610 = vld [vmem:[#allocation5 + $0xdd0] sm:$0xff]
    %v611 = vld [vmem:[#allocation5 + $0xdd8] sm:$0xff]
    %v612 = vld [vmem:[#allocation5 + $0xde0] sm:$0xff]
    %v613 = vld [vmem:[#allocation5 + $0xde8] sm:$0xff]
    %v614 = vld [vmem:[#allocation5 + $0xdf0] sm:$0xff]
    %v615 = vld [vmem:[#allocation5 + $0xdf8] sm:$0xff]
    %v616 = vld [vmem:[#allocation5 + $0xe00] sm:$0xff]
    %v617 = vld [vmem:[#allocation5 + $0xe08] sm:$0xff]
    %v618 = vld [vmem:[#allocation5 + $0xe10] sm:$0xff]
    %v619 = vld [vmem:[#allocation5 + $0xe18] sm:$0xff]
    %v620 = vld [vmem:[#allocation5 + $0xe20] sm:$0xff]
    %v621 = vld [vmem:[#allocation5 + $0xe28] sm:$0xff]
    %v622 = vld [vmem:[#allocation5 + $0xe30] sm:$0xff]
    %v623 = vld [vmem:[#allocation5 + $0xe38] sm:$0xff]
    %v624 = vld [vmem:[#allocation5 + $0xe40] sm:$0xff]
    %v625 = vld [vmem:[#allocation5 + $0xe48] sm:$0xff]
    %v626 = vld [vmem:[#allocation5 + $0xe50] sm:$0xff]
    %v627 = vld [vmem:[#allocation5 + $0xe58] sm:$0xff]
    %v628 = vld [vmem:[#allocation5 + $0xe60] sm:$0xff]
    %v629 = vld [vmem:[#allocation5 + $0xe68] sm:$0xff]
    %v630 = vld [vmem:[#allocation5 + $0xe70] sm:$0xff]
    %v631 = vld [vmem:[#allocation5 + $0xe78] sm:$0xff]
    %v632 = vld [vmem:[#allocation5 + $0xe80] sm:$0xff]
    %v633 = vld [vmem:[#allocation5 + $0xe88] sm:$0xff]
    %v634 = vld [vmem:[#allocation5 + $0xe90] sm:$0xff]
    %v635 = vld [vmem:[#allocation5 + $0xe98] sm:$0xff]
    %v636 = vld [vmem:[#allocation5 + $0xea0] sm:$0xff]
    %v637 = vld [vmem:[#allocation5 + $0xea8] sm:$0xff]
    %v638 = vld [vmem:[#allocation5 + $0xeb0] sm:$0xff]
    %v639 = vld [vmem:[#allocation5 + $0xeb8] sm:$0xff]
    %v640 = vld [vmem:[#allocation5 + $0xec0] sm:$0xff]
    %v641 = vld [vmem:[#allocation5 + $0xec8] sm:$0xff]
    %v642 = vld [vmem:[#allocation5 + $0xed0] sm:$0xff]
    %v643 = vld [vmem:[#allocation5 + $0xed8] sm:$0xff]
    %v644 = vld [vmem:[#allocation5 + $0xee0] sm:$0xff]
    %v645 = vld [vmem:[#allocation5 + $0xee8] sm:$0xff]
    %v646 = vld [vmem:[#allocation5 + $0xef0] sm:$0xff]
    %v647 = vld [vmem:[#allocation5 + $0xef8] sm:$0xff]
    %v648 = vld [vmem:[#allocation5 + $0xf00] sm:$0xff]
    %v649 = vld [vmem:[#allocation5 + $0xf08] sm:$0xff]
    %v650 = vld [vmem:[#allocation5 + $0xf10] sm:$0xff]
    %v651 = vld [vmem:[#allocation5 + $0xf18] sm:$0xff]
    %v652 = vld [vmem:[#allocation5 + $0xf20] sm:$0xff]
    %v653 = vld [vmem:[#allocation5 + $0xf28] sm:$0xff]
    %v654 = vld [vmem:[#allocation5 + $0xf30] sm:$0xff]
    %v655 = vld [vmem:[#allocation5 + $0xf38] sm:$0xff]
    %v656 = vld [vmem:[#allocation5 + $0xf40] sm:$0xff]
    %v657 = vld [vmem:[#allocation5 + $0xf48] sm:$0xff]
    %v658 = vld [vmem:[#allocation5 + $0xf50] sm:$0xff]
    %v659 = vld [vmem:[#allocation5 + $0xf58] sm:$0xff]
    %v660 = vld [vmem:[#allocation5 + $0xf60] sm:$0xff]
    %v661 = vld [vmem:[#allocation5 + $0xf68] sm:$0xff]
    %v662 = vld [vmem:[#allocation5 + $0xf70] sm:$0xff]
    %v663 = vld [vmem:[#allocation5 + $0xf78] sm:$0xff]
    %v664 = vld [vmem:[#allocation5 + $0xf80] sm:$0xff]
    %v665 = vld [vmem:[#allocation5 + $0xf88] sm:$0xff]
    %v666 = vld [vmem:[#allocation5 + $0xf90] sm:$0xff]
    %v667 = vld [vmem:[#allocation5 + $0xf98] sm:$0xff]
    %v668 = vld [vmem:[#allocation5 + $0xfa0] sm:$0xff]
    %v669 = vld [vmem:[#allocation5 + $0xfa8] sm:$0xff]
    %v670 = vld [vmem:[#allocation5 + $0xfb0] sm:$0xff]
    %v671 = vld [vmem:[#allocation5 + $0xfb8] sm:$0xff]
    %v672 = vld [vmem:[#allocation5 + $0xfc0] sm:$0xff]
    %v673 = vld [vmem:[#allocation5 + $0xfc8] sm:$0xff]
    %v674 = vld [vmem:[#allocation5 + $0xfd0] sm:$0xff]
    %v675 = vld [vmem:[#allocation5 + $0xfd8] sm:$0xff]
    %v676 = vld [vmem:[#allocation5 + $0xfe0] sm:$0xff]
    %v677 = vld [vmem:[#allocation5 + $0xfe8] sm:$0xff]
    %v678 = vld [vmem:[#allocation5 + $0xff0] sm:$0xff]
    %v679 = vld [vmem:[#allocation5 + $0xff8] sm:$0xff]
    %680 = vmatprep.subr.mxu0 0.0
    %681 = vmatpush1.msra.mxu0 %v168
    %682 = vmatprep.subr.mxu0 0.0
    %683 = vmatpush1.msra.mxu0 %v169
    %684 = vmatprep.subr.mxu0 0.0
    %685 = vmatpush1.msra.mxu0 %v170
    %686 = vmatprep.subr.mxu0 0.0
    %687 = vmatpush1.msra.mxu0 %v171
    %688 = vmatprep.subr.mxu0 0.0
    %689 = vmatpush1.msra.mxu0 %v172
    %690 = vmatprep.subr.mxu0 0.0
    %691 = vmatpush1.msra.mxu0 %v173
    %692 = vmatprep.subr.mxu0 0.0
    %693 = vmatpush1.msra.mxu0 %v174
    %694 = vmatprep.subr.mxu0 0.0
    %695 = vmatpush1.msra.mxu0 %v175
    %696 = vmatprep.subr.mxu0 0.0
    %697 = vmatpush1.msra.mxu0 %v176
    %698 = vmatprep.subr.mxu0 0.0
    %699 = vmatpush1.msra.mxu0 %v177
    %700 = vmatprep.subr.mxu0 0.0
    %701 = vmatpush1.msra.mxu0 %v178
    %702 = vmatprep.subr.mxu0 0.0
    %703 = vmatpush1.msra.mxu0 %v179
    %704 = vmatprep.subr.mxu0 0.0
    %705 = vmatpush1.msra.mxu0 %v180
    %706 = vmatprep.subr.mxu0 0.0
    %707 = vmatpush1.msra.mxu0 %v181
    %708 = vmatprep.subr.mxu0 0.0
    %709 = vmatpush1.msra.mxu0 %v182
    %710 = vmatprep.subr.mxu0 0.0
    %711 = vmatpush1.msra.mxu0 %v183
    %712 = vmatprep.subr.mxu0 0.0
    %713 = vmatpush1.msra.mxu0 %v184
    %714 = vmatprep.subr.mxu0 0.0
    %715 = vmatpush1.msra.mxu0 %v185
    %716 = vmatprep.subr.mxu0 0.0
    %717 = vmatpush1.msra.mxu0 %v186
    %718 = vmatprep.subr.mxu0 0.0
    %719 = vmatpush1.msra.mxu0 %v187
    %720 = vmatprep.subr.mxu0 0.0
    %721 = vmatpush1.msra.mxu0 %v188
    %722 = vmatprep.subr.mxu0 0.0
    %723 = vmatpush1.msra.mxu0 %v189
    %724 = vmatprep.subr.mxu0 0.0
    %725 = vmatpush1.msra.mxu0 %v190
    %726 = vmatprep.subr.mxu0 0.0
    %727 = vmatpush1.msra.mxu0 %v191
    %728 = vmatprep.subr.mxu0 0.0
    %729 = vmatpush1.msra.mxu0 %v192
    %730 = vmatprep.subr.mxu0 0.0
    %731 = vmatpush1.msra.mxu0 %v193
    %732 = vmatprep.subr.mxu0 0.0
    %733 = vmatpush1.msra.mxu0 %v194
    %734 = vmatprep.subr.mxu0 0.0
    %735 = vmatpush1.msra.mxu0 %v195
    %736 = vmatprep.subr.mxu0 0.0
    %737 = vmatpush1.msra.mxu0 %v196
    %738 = vmatprep.subr.mxu0 0.0
    %739 = vmatpush1.msra.mxu0 %v197
    %740 = vmatprep.subr.mxu0 0.0
    %741 = vmatpush1.msra.mxu0 %v198
    %742 = vmatprep.subr.mxu0 0.0
    %743 = vmatpush1.msra.mxu0 %v199
    %744 = vmatprep.mubr.f32.mxu0 %v41
    %745 = vmatmul.mubr.f32.gmra.mrb[0].mxu0 %v40
    %v746 = vpop.f32.mrb[0].mxu0
    %v747 = vadd.f32 0.0, %v746
    %v748 = vpop.f32.mrb[0].mxu0
    %749 = vmatprep.mubr.f32.mxu0 %v73
    %750 = vmatmul.mubr.f32.gmra.mrb[0].mxu0 %v72
    %v751 = vpop.f32.mrb[0].mxu0
    %v752 = vadd.f32 0.0, %v751
    %v753 = vpop.f32.mrb[0].mxu0
    %754 = vmatprep.mubr.f32.mxu0 %v105
    %755 = vmatmul.mubr.f32.gmra.mrb[0].mxu0 %v104
    %v756 = vpop.f32.mrb[0].mxu0
    %v757 = vadd.f32 0.0, %v756
    %v758 = vpop.f32.mrb[0].mxu0
    %759 = vmatprep.mubr.f32.mxu0 %v137
    %760 = vmatmul.mubr.f32.gmra.mrb[0].mxu0 %v136
    %v761 = vpop.f32.mrb[0].mxu0
    %v762 = vadd.f32 0.0, %v761
    %v763 = vpop.f32.mrb[0].mxu0
    %764 = vdwg.mxu0
    %765 = vmatprep.subr.mxu0 0.0
    %766 = vmatpush1.msra.mxu0 %v200
    %767 = vmatprep.subr.mxu0 0.0
    %768 = vmatpush1.msra.mxu0 %v201
    %769 = vmatprep.subr.mxu0 0.0
    %770 = vmatpush1.msra.mxu0 %v202
    %771 = vmatprep.subr.mxu0 0.0
    %772 = vmatpush1.msra.mxu0 %v203
    %773 = vmatprep.subr.mxu0 0.0
    %774 = vmatpush1.msra.mxu0 %v204
    %775 = vmatprep.subr.mxu0 0.0
    %776 = vmatpush1.msra.mxu0 %v205
    %777 = vmatprep.subr.mxu0 0.0
    %778 = vmatpush1.msra.mxu0 %v206
    %779 = vmatprep.subr.mxu0 0.0
    %780 = vmatpush1.msra.mxu0 %v207
    %781 = vmatprep.subr.mxu0 0.0
    %782 = vmatpush1.msra.mxu0 %v208
    %783 = vmatprep.subr.mxu0 0.0
    %784 = vmatpush1.msra.mxu0 %v209
    %785 = vmatprep.subr.mxu0 0.0
    %786 = vmatpush1.msra.mxu0 %v210
    %787 = vmatprep.subr.mxu0 0.0
    %788 = vmatpush1.msra.mxu0 %v211
    %789 = vmatprep.subr.mxu0 0.0
    %790 = vmatpush1.msra.mxu0 %v212
    %791 = vmatprep.subr.mxu0 0.0
    %792 = vmatpush1.msra.mxu0 %v213
    %793 = vmatprep.subr.mxu0 0.0
    %794 = vmatpush1.msra.mxu0 %v214
    %795 = vmatprep.subr.mxu0 0.0
    %796 = vmatpush1.msra.mxu0 %v215
    %797 = vmatprep.subr.mxu0 0.0
    %798 = vmatpush1.msra.mxu0 %v216
    %799 = vmatprep.subr.mxu0 0.0
    %800 = vmatpush1.msra.mxu0 %v217
    %801 = vmatprep.subr.mxu0 0.0
    %802 = vmatpush1.msra.mxu0 %v218
    %803 = vmatprep.subr.mxu0 0.0
    %804 = vmatpush1.msra.mxu0 %v219
    %805 = vmatprep.subr.mxu0 0.0
    %806 = vmatpush1.msra.mxu0 %v220
    %807 = vmatprep.subr.mxu0 0.0
    %808 = vmatpush1.msra.mxu0 %v221
    %809 = vmatprep.subr.mxu0 0.0
    %810 = vmatpush1.msra.mxu0 %v222
    %811 = vmatprep.subr.mxu0 0.0
    %812 = vmatpush1.msra.mxu0 %v223
    %813 = vmatprep.subr.mxu0 0.0
    %814 = vmatpush1.msra.mxu0 %v224
    %815 = vmatprep.subr.mxu0 0.0
    %816 = vmatpush1.msra.mxu0 %v225
    %817 = vmatprep.subr.mxu0 0.0
    %818 = vmatpush1.msra.mxu0 %v226
    %819 = vmatprep.subr.mxu0 0.0
    %820 = vmatpush1.msra.mxu0 %v227
    %821 = vmatprep.subr.mxu0 0.0
    %822 = vmatpush1.msra.mxu0 %v228
    %823 = vmatprep.subr.mxu0 0.0
    %824 = vmatpush1.msra.mxu0 %v229
    %825 = vmatprep.subr.mxu0 0.0
    %826 = vmatpush1.msra.mxu0 %v230
    %827 = vmatprep.subr.mxu0 0.0
    %828 = vmatpush1.msra.mxu0 %v231
    %829 = vmatprep.mubr.f32.mxu0 %v43
    %830 = vmatmul.mubr.f32.gmra.mrb[0].mxu0 %v42
    %v831 = vpop.f32.mrb[0].mxu0
    %v832 = vadd.f32 %v747, %v831
    %v833 = vpop.f32.mrb[0].mxu0
    %834 = vmatprep.mubr.f32.mxu0 %v75
    %835 = vmatmul.mubr.f32.gmra.mrb[0].mxu0 %v74
    %v836 = vpop.f32.mrb[0].mxu0
    %v837 = vadd.f32 %v752, %v836
    %v838 = vpop.f32.mrb[0].mxu0
    %839 = vmatprep.mubr.f32.mxu0 %v107
    %840 = vmatmul.mubr.f32.gmra.mrb[0].mxu0 %v106
    %v841 = vpop.f32.mrb[0].mxu0
    %v842 = vadd.f32 %v757, %v841
    %v843 = vpop.f32.mrb[0].mxu0
    %844 = vmatprep.mubr.f32.mxu0 %v139
    %845 = vmatmul.mubr.f32.gmra.mrb[0].mxu0 %v138
    %v846 = vpop.f32.mrb[0].mxu0
    %v847 = vadd.f32 %v762, %v846
    %v848 = vpop.f32.mrb[0].mxu0
    %849 = vdwg.mxu0
    %850 = vmatprep.subr.mxu0 0.0
    %851 = vmatpush1.msra.mxu0 %v232
    %852 = vmatprep.subr.mxu0 0.0
    %853 = vmatpush1.msra.mxu0 %v233
    %854 = vmatprep.subr.mxu0 0.0
    %855 = vmatpush1.msra.mxu0 %v234
    %856 = vmatprep.subr.mxu0 0.0
    %857 = vmatpush1.msra.mxu0 %v235
    %858 = vmatprep.subr.mxu0 0.0
    %859 = vmatpush1.msra.mxu0 %v236
    %860 = vmatprep.subr.mxu0 0.0
    %861 = vmatpush1.msra.mxu0 %v237
    %862 = vmatprep.subr.mxu0 0.0
    %863 = vmatpush1.msra.mxu0 %v238
    %864 = vmatprep.subr.mxu0 0.0
    %865 = vmatpush1.msra.mxu0 %v239
    %866 = vmatprep.subr.mxu0 0.0
    %867 = vmatpush1.msra.mxu0 %v240
    %868 = vmatprep.subr.mxu0 0.0
    %869 = vmatpush1.msra.mxu0 %v241
    %870 = vmatprep.subr.mxu0 0.0
    %871 = vmatpush1.msra.mxu0 %v242
    %872 = vmatprep.subr.mxu0 0.0
    %873 = vmatpush1.msra.mxu0 %v243
    %874 = vmatprep.subr.mxu0 0.0
    %875 = vmatpush1.msra.mxu0 %v244
    %876 = vmatprep.subr.mxu0 0.0
    %877 = vmatpush1.msra.mxu0 %v245
    %878 = vmatprep.subr.mxu0 0.0
    %879 = vmatpush1.msra.mxu0 %v246
    %880 = vmatprep.subr.mxu0 0.0
    %881 = vmatpush1.msra.mxu0 %v247
    %882 = vmatprep.subr.mxu0 0.0
    %883 = vmatpush1.msra.mxu0 %v248
    %884 = vmatprep.subr.mxu0 0.0
    %885 = vmatpush1.msra.mxu0 %v249
    %886 = vmatprep.subr.mxu0 0.0
    %887 = vmatpush1.msra.mxu0 %v250
    %888 = vmatprep.subr.mxu0 0.0
    %889 = vmatpush1.msra.mxu0 %v251
    %890 = vmatprep.subr.mxu0 0.0
    %891 = vmatpush1.msra.mxu0 %v252
    %892 = vmatprep.subr.mxu0 0.0
    %893 = vmatpush1.msra.mxu0 %v253
    %894 = vmatprep.subr.mxu0 0.0
    %895 = vmatpush1.msra.mxu0 %v254
    %896 = vmatprep.subr.mxu0 0.0
    %897 = vmatpush1.msra.mxu0 %v255
    %898 = vmatprep.subr.mxu0 0.0
    %899 = vmatpush1.msra.mxu0 %v256
    %900 = vmatprep.subr.mxu0 0.0
    %901 = vmatpush1.msra.mxu0 %v257
    %902 = vmatprep.subr.mxu0 0.0
    %903 = vmatpush1.msra.mxu0 %v258
    %904 = vmatprep.subr.mxu0 0.0
    %905 = vmatpush1.msra.mxu0 %v259
    %906 = vmatprep.subr.mxu0 0.0
    %907 = vmatpush1.msra.mxu0 %v260
    %908 = vmatprep.subr.mxu0 0.0
    %909 = vmatpush1.msra.mxu0 %v261
    %910 = vmatprep.subr.mxu0 0.0
    %911 = vmatpush1.msra.mxu0 %v262
    %912 = vmatprep.subr.mxu0 0.0
    %913 = vmatpush1.msra.mxu0 %v263
    %914 = vmatprep.mubr.f32.mxu0 %v45
    %915 = vmatmul.mubr.f32.gmra.mrb[0].mxu0 %v44
    %v916 = vpop.f32.mrb[0].mxu0
    %v917 = vadd.f32 %v832, %v916
    %v918 = vpop.f32.mrb[0].mxu0
    %919 = vmatprep.mubr.f32.mxu0 %v77
    %920 = vmatmul.mubr.f32.gmra.mrb[0].mxu0 %v76
    %v921 = vpop.f32.mrb[0].mxu0
    %v922 = vadd.f32 %v837, %v921
    %v923 = vpop.f32.mrb[0].mxu0
    %924 = vmatprep.mubr.f32.mxu0 %v109
    %925 = vmatmul.mubr.f32.gmra.mrb[0].mxu0 %v108
    %v926 = vpop.f32.mrb[0].mxu0
    %v927 = vadd.f32 %v842, %v926
    %v928 = vpop.f32.mrb[0].mxu0
    %929 = vmatprep.mubr.f32.mxu0 %v141
    %930 = vmatmul.mubr.f32.gmra.mrb[0].mxu0 %v140
    %v931 = vpop.f32.mrb[0].mxu0
    %v932 = vadd.f32 %v847, %v931
    %v933 = vpop.f32.mrb[0].mxu0
    %934 = vdwg.mxu0
    %935 = vmatprep.subr.mxu0 0.0
    %936 = vmatpush1.msra.mxu0 %v264
    %937 = vmatprep.subr.mxu0 0.0
    %938 = vmatpush1.msra.mxu0 %v265
    %939 = vmatprep.subr.mxu0 0.0
    %940 = vmatpush1.msra.mxu0 %v266
    %941 = vmatprep.subr.mxu0 0.0
    %942 = vmatpush1.msra.mxu0 %v267
    %943 = vmatprep.subr.mxu0 0.0
    %944 = vmatpush1.msra.mxu0 %v268
    %945 = vmatprep.subr.mxu0 0.0
    %946 = vmatpush1.msra.mxu0 %v269
    %947 = vmatprep.subr.mxu0 0.0
    %948 = vmatpush1.msra.mxu0 %v270
    %949 = vmatprep.subr.mxu0 0.0
    %950 = vmatpush1.msra.mxu0 %v271
    %951 = vmatprep.subr.mxu0 0.0
    %952 = vmatpush1.msra.mxu0 %v272
    %953 = vmatprep.subr.mxu0 0.0
    %954 = vmatpush1.msra.mxu0 %v273
    %955 = vmatprep.subr.mxu0 0.0
    %956 = vmatpush1.msra.mxu0 %v274
    %957 = vmatprep.subr.mxu0 0.0
    %958 = vmatpush1.msra.mxu0 %v275
    %959 = vmatprep.subr.mxu0 0.0
    %960 = vmatpush1.msra.mxu0 %v276
    %961 = vmatprep.subr.mxu0 0.0
    %962 = vmatpush1.msra.mxu0 %v277
    %963 = vmatprep.subr.mxu0 0.0
    %964 = vmatpush1.msra.mxu0 %v278
    %965 = vmatprep.subr.mxu0 0.0
    %966 = vmatpush1.msra.mxu0 %v279
    %967 = vmatprep.subr.mxu0 0.0
    %968 = vmatpush1.msra.mxu0 %v280
    %969 = vmatprep.subr.mxu0 0.0
    %970 = vmatpush1.msra.mxu0 %v281
    %971 = vmatprep.subr.mxu0 0.0
    %972 = vmatpush1.msra.mxu0 %v282
    %973 = vmatprep.subr.mxu0 0.0
    %974 = vmatpush1.msra.mxu0 %v283
    %975 = vmatprep.subr.mxu0 0.0
    %976 = vmatpush1.msra.mxu0 %v284
    %977 = vmatprep.subr.mxu0 0.0
    %978 = vmatpush1.msra.mxu0 %v285
    %979 = vmatprep.subr.mxu0 0.0
    %980 = vmatpush1.msra.mxu0 %v286
    %981 = vmatprep.subr.mxu0 0.0
    %982 = vmatpush1.msra.mxu0 %v287
    %983 = vmatprep.subr.mxu0 0.0
    %984 = vmatpush1.msra.mxu0 %v288
    %985 = vmatprep.subr.mxu0 0.0
    %986 = vmatpush1.msra.mxu0 %v289
    %987 = vmatprep.subr.mxu0 0.0
    %988 = vmatpush1.msra.mxu0 %v290
    %989 = vmatprep.subr.mxu0 0.0
    %990 = vmatpush1.msra.mxu0 %v291
    %991 = vmatprep.subr.mxu0 0.0
    %992 = vmatpush1.msra.mxu0 %v292
    %993 = vmatprep.subr.mxu0 0.0
    %994 = vmatpush1.msra.mxu0 %v293
    %995 = vmatprep.subr.mxu0 0.0
    %996 = vmatpush1.msra.mxu0 %v294
    %997 = vmatprep.subr.mxu0 0.0
    %998 = vmatpush1.msra.mxu0 %v295
    %999 = vmatprep.mubr.f32.mxu0 %v47
    %1000 = vmatmul.mubr.f32.gmra.mrb[0].mxu0 %v46
    %v1001 = vpop.f32.mrb[0].mxu0
    %v1002 = vadd.f32 %v917, %v1001
    %v1003 = vpop.f32.mrb[0].mxu0
    %1004 = vmatprep.mubr.f32.mxu0 %v79
    %1005 = vmatmul.mubr.f32.gmra.mrb[0].mxu0 %v78
    %v1006 = vpop.f32.mrb[0].mxu0
    %v1007 = vadd.f32 %v922, %v1006
    %v1008 = vpop.f32.mrb[0].mxu0
    %1009 = vmatprep.mubr.f32.mxu0 %v111
    %1010 = vmatmul.mubr.f32.gmra.mrb[0].mxu0 %v110
    %v1011 = vpop.f32.mrb[0].mxu0
    %v1012 = vadd.f32 %v927, %v1011
    %v1013 = vpop.f32.mrb[0].mxu0
    %1014 = vmatprep.mubr.f32.mxu0 %v143
    %1015 = vmatmul.mubr.f32.gmra.mrb[0].mxu0 %v142
    %v1016 = vpop.f32.mrb[0].mxu0
    %v1017 = vadd.f32 %v932, %v1016
    %v1018 = vpop.f32.mrb[0].mxu0
    %1019 = vdwg.mxu0
    %1020 = vmatprep.subr.mxu0 0.0
    %1021 = vmatpush1.msra.mxu0 %v296
    %1022 = vmatprep.subr.mxu0 0.0
    %1023 = vmatpush1.msra.mxu0 %v297
    %1024 = vmatprep.subr.mxu0 0.0
    %1025 = vmatpush1.msra.mxu0 %v298
    %1026 = vmatprep.subr.mxu0 0.0
    %1027 = vmatpush1.msra.mxu0 %v299
    %1028 = vmatprep.subr.mxu0 0.0
    %1029 = vmatpush1.msra.mxu0 %v300
    %1030 = vmatprep.subr.mxu0 0.0
    %1031 = vmatpush1.msra.mxu0 %v301
    %1032 = vmatprep.subr.mxu0 0.0
    %1033 = vmatpush1.msra.mxu0 %v302
    %1034 = vmatprep.subr.mxu0 0.0
    %1035 = vmatpush1.msra.mxu0 %v303
    %1036 = vmatprep.subr.mxu0 0.0
    %1037 = vmatpush1.msra.mxu0 %v304
    %1038 = vmatprep.subr.mxu0 0.0
    %1039 = vmatpush1.msra.mxu0 %v305
    %1040 = vmatprep.subr.mxu0 0.0
    %1041 = vmatpush1.msra.mxu0 %v306
    %1042 = vmatprep.subr.mxu0 0.0
    %1043 = vmatpush1.msra.mxu0 %v307
    %1044 = vmatprep.subr.mxu0 0.0
    %1045 = vmatpush1.msra.mxu0 %v308
    %1046 = vmatprep.subr.mxu0 0.0
    %1047 = vmatpush1.msra.mxu0 %v309
    %1048 = vmatprep.subr.mxu0 0.0
    %1049 = vmatpush1.msra.mxu0 %v310
    %1050 = vmatprep.subr.mxu0 0.0
    %1051 = vmatpush1.msra.mxu0 %v311
    %1052 = vmatprep.subr.mxu0 0.0
    %1053 = vmatpush1.msra.mxu0 %v312
    %1054 = vmatprep.subr.mxu0 0.0
    %1055 = vmatpush1.msra.mxu0 %v313
    %1056 = vmatprep.subr.mxu0 0.0
    %1057 = vmatpush1.msra.mxu0 %v314
    %1058 = vmatprep.subr.mxu0 0.0
    %1059 = vmatpush1.msra.mxu0 %v315
    %1060 = vmatprep.subr.mxu0 0.0
    %1061 = vmatpush1.msra.mxu0 %v316
    %1062 = vmatprep.subr.mxu0 0.0
    %1063 = vmatpush1.msra.mxu0 %v317
    %1064 = vmatprep.subr.mxu0 0.0
    %1065 = vmatpush1.msra.mxu0 %v318
    %1066 = vmatprep.subr.mxu0 0.0
    %1067 = vmatpush1.msra.mxu0 %v319
    %1068 = vmatprep.subr.mxu0 0.0
    %1069 = vmatpush1.msra.mxu0 %v320
    %1070 = vmatprep.subr.mxu0 0.0
    %1071 = vmatpush1.msra.mxu0 %v321
    %1072 = vmatprep.subr.mxu0 0.0
    %1073 = vmatpush1.msra.mxu0 %v322
    %1074 = vmatprep.subr.mxu0 0.0
    %1075 = vmatpush1.msra.mxu0 %v323
    %1076 = vmatprep.subr.mxu0 0.0
    %1077 = vmatpush1.msra.mxu0 %v324
    %1078 = vmatprep.subr.mxu0 0.0
    %1079 = vmatpush1.msra.mxu0 %v325
    %1080 = vmatprep.subr.mxu0 0.0
    %1081 = vmatpush1.msra.mxu0 %v326
    %1082 = vmatprep.subr.mxu0 0.0
    %1083 = vmatpush1.msra.mxu0 %v327
    %1084 = vmatprep.mubr.f32.mxu0 %v49
    %1085 = vmatmul.mubr.f32.gmra.mrb[0].mxu0 %v48
    %v1086 = vpop.f32.mrb[0].mxu0
    %v1087 = vadd.f32 %v1002, %v1086
    %v1088 = vpop.f32.mrb[0].mxu0
    %1089 = vmatprep.mubr.f32.mxu0 %v81
    %1090 = vmatmul.mubr.f32.gmra.mrb[0].mxu0 %v80
    %v1091 = vpop.f32.mrb[0].mxu0
    %v1092 = vadd.f32 %v1007, %v1091
    %v1093 = vpop.f32.mrb[0].mxu0
    %1094 = vmatprep.mubr.f32.mxu0 %v113
    %1095 = vmatmul.mubr.f32.gmra.mrb[0].mxu0 %v112
    %v1096 = vpop.f32.mrb[0].mxu0
    %v1097 = vadd.f32 %v1012, %v1096
    %v1098 = vpop.f32.mrb[0].mxu0
    %1099 = vmatprep.mubr.f32.mxu0 %v145
    %1100 = vmatmul.mubr.f32.gmra.mrb[0].mxu0 %v144
    %v1101 = vpop.f32.mrb[0].mxu0
    %v1102 = vadd.f32 %v1017, %v1101
    %v1103 = vpop.f32.mrb[0].mxu0
    %1104 = vdwg.mxu0
    %1105 = vmatprep.subr.mxu0 0.0
    %1106 = vmatpush1.msra.mxu0 %v328
    %1107 = vmatprep.subr.mxu0 0.0
    %1108 = vmatpush1.msra.mxu0 %v329
    %1109 = vmatprep.subr.mxu0 0.0
    %1110 = vmatpush1.msra.mxu0 %v330
    %1111 = vmatprep.subr.mxu0 0.0
    %1112 = vmatpush1.msra.mxu0 %v331
    %1113 = vmatprep.subr.mxu0 0.0
    %1114 = vmatpush1.msra.mxu0 %v332
    %1115 = vmatprep.subr.mxu0 0.0
    %1116 = vmatpush1.msra.mxu0 %v333
    %1117 = vmatprep.subr.mxu0 0.0
    %1118 = vmatpush1.msra.mxu0 %v334
    %1119 = vmatprep.subr.mxu0 0.0
    %1120 = vmatpush1.msra.mxu0 %v335
    %1121 = vmatprep.subr.mxu0 0.0
    %1122 = vmatpush1.msra.mxu0 %v336
    %1123 = vmatprep.subr.mxu0 0.0
    %1124 = vmatpush1.msra.mxu0 %v337
    %1125 = vmatprep.subr.mxu0 0.0
    %1126 = vmatpush1.msra.mxu0 %v338
    %1127 = vmatprep.subr.mxu0 0.0
    %1128 = vmatpush1.msra.mxu0 %v339
    %1129 = vmatprep.subr.mxu0 0.0
    %1130 = vmatpush1.msra.mxu0 %v340
    %1131 = vmatprep.subr.mxu0 0.0
    %1132 = vmatpush1.msra.mxu0 %v341
    %1133 = vmatprep.subr.mxu0 0.0
    %1134 = vmatpush1.msra.mxu0 %v342
    %1135 = vmatprep.subr.mxu0 0.0
    %1136 = vmatpush1.msra.mxu0 %v343
    %1137 = vmatprep.subr.mxu0 0.0
    %1138 = vmatpush1.msra.mxu0 %v344
    %1139 = vmatprep.subr.mxu0 0.0
    %1140 = vmatpush1.msra.mxu0 %v345
    %1141 = vmatprep.subr.mxu0 0.0
    %1142 = vmatpush1.msra.mxu0 %v346
    %1143 = vmatprep.subr.mxu0 0.0
    %1144 = vmatpush1.msra.mxu0 %v347
    %1145 = vmatprep.subr.mxu0 0.0
    %1146 = vmatpush1.msra.mxu0 %v348
    %1147 = vmatprep.subr.mxu0 0.0
    %1148 = vmatpush1.msra.mxu0 %v349
    %1149 = vmatprep.subr.mxu0 0.0
    %1150 = vmatpush1.msra.mxu0 %v350
    %1151 = vmatprep.subr.mxu0 0.0
    %1152 = vmatpush1.msra.mxu0 %v351
    %1153 = vmatprep.subr.mxu0 0.0
    %1154 = vmatpush1.msra.mxu0 %v352
    %1155 = vmatprep.subr.mxu0 0.0
    %1156 = vmatpush1.msra.mxu0 %v353
    %1157 = vmatprep.subr.mxu0 0.0
    %1158 = vmatpush1.msra.mxu0 %v354
    %1159 = vmatprep.subr.mxu0 0.0
    %1160 = vmatpush1.msra.mxu0 %v355
    %1161 = vmatprep.subr.mxu0 0.0
    %1162 = vmatpush1.msra.mxu0 %v356
    %1163 = vmatprep.subr.mxu0 0.0
    %1164 = vmatpush1.msra.mxu0 %v357
    %1165 = vmatprep.subr.mxu0 0.0
    %1166 = vmatpush1.msra.mxu0 %v358
    %1167 = vmatprep.subr.mxu0 0.0
    %1168 = vmatpush1.msra.mxu0 %v359
    %1169 = vmatprep.mubr.f32.mxu0 %v51
    %1170 = vmatmul.mubr.f32.gmra.mrb[0].mxu0 %v50
    %v1171 = vpop.f32.mrb[0].mxu0
    %v1172 = vadd.f32 %v1087, %v1171
    %v1173 = vpop.f32.mrb[0].mxu0
    %1174 = vmatprep.mubr.f32.mxu0 %v83
    %1175 = vmatmul.mubr.f32.gmra.mrb[0].mxu0 %v82
    %v1176 = vpop.f32.mrb[0].mxu0
    %v1177 = vadd.f32 %v1092, %v1176
    %v1178 = vpop.f32.mrb[0].mxu0
    %1179 = vmatprep.mubr.f32.mxu0 %v115
    %1180 = vmatmul.mubr.f32.gmra.mrb[0].mxu0 %v114
    %v1181 = vpop.f32.mrb[0].mxu0
    %v1182 = vadd.f32 %v1097, %v1181
    %v1183 = vpop.f32.mrb[0].mxu0
    %1184 = vmatprep.mubr.f32.mxu0 %v147
    %1185 = vmatmul.mubr.f32.gmra.mrb[0].mxu0 %v146
    %v1186 = vpop.f32.mrb[0].mxu0
    %v1187 = vadd.f32 %v1102, %v1186
    %v1188 = vpop.f32.mrb[0].mxu0
    %1189 = vdwg.mxu0
    %1190 = vmatprep.subr.mxu0 0.0
    %1191 = vmatpush1.msra.mxu0 %v360
    %1192 = vmatprep.subr.mxu0 0.0
    %1193 = vmatpush1.msra.mxu0 %v361
    %1194 = vmatprep.subr.mxu0 0.0
    %1195 = vmatpush1.msra.mxu0 %v362
    %1196 = vmatprep.subr.mxu0 0.0
    %1197 = vmatpush1.msra.mxu0 %v363
    %1198 = vmatprep.subr.mxu0 0.0
    %1199 = vmatpush1.msra.mxu0 %v364
    %1200 = vmatprep.subr.mxu0 0.0
    %1201 = vmatpush1.msra.mxu0 %v365
    %1202 = vmatprep.subr.mxu0 0.0
    %1203 = vmatpush1.msra.mxu0 %v366
    %1204 = vmatprep.subr.mxu0 0.0
    %1205 = vmatpush1.msra.mxu0 %v367
    %1206 = vmatprep.subr.mxu0 0.0
    %1207 = vmatpush1.msra.mxu0 %v368
    %1208 = vmatprep.subr.mxu0 0.0
    %1209 = vmatpush1.msra.mxu0 %v369
    %1210 = vmatprep.subr.mxu0 0.0
    %1211 = vmatpush1.msra.mxu0 %v370
    %1212 = vmatprep.subr.mxu0 0.0
    %1213 = vmatpush1.msra.mxu0 %v371
    %1214 = vmatprep.subr.mxu0 0.0
    %1215 = vmatpush1.msra.mxu0 %v372
    %1216 = vmatprep.subr.mxu0 0.0
    %1217 = vmatpush1.msra.mxu0 %v373
    %1218 = vmatprep.subr.mxu0 0.0
    %1219 = vmatpush1.msra.mxu0 %v374
    %1220 = vmatprep.subr.mxu0 0.0
    %1221 = vmatpush1.msra.mxu0 %v375
    %1222 = vmatprep.subr.mxu0 0.0
    %1223 = vmatpush1.msra.mxu0 %v376
    %1224 = vmatprep.subr.mxu0 0.0
    %1225 = vmatpush1.msra.mxu0 %v377
    %1226 = vmatprep.subr.mxu0 0.0
    %1227 = vmatpush1.msra.mxu0 %v378
    %1228 = vmatprep.subr.mxu0 0.0
    %1229 = vmatpush1.msra.mxu0 %v379
    %1230 = vmatprep.subr.mxu0 0.0
    %1231 = vmatpush1.msra.mxu0 %v380
    %1232 = vmatprep.subr.mxu0 0.0
    %1233 = vmatpush1.msra.mxu0 %v381
    %1234 = vmatprep.subr.mxu0 0.0
    %1235 = vmatpush1.msra.mxu0 %v382
    %1236 = vmatprep.subr.mxu0 0.0
    %1237 = vmatpush1.msra.mxu0 %v383
    %1238 = vmatprep.subr.mxu0 0.0
    %1239 = vmatpush1.msra.mxu0 %v384
    %1240 = vmatprep.subr.mxu0 0.0
    %1241 = vmatpush1.msra.mxu0 %v385
    %1242 = vmatprep.subr.mxu0 0.0
    %1243 = vmatpush1.msra.mxu0 %v386
    %1244 = vmatprep.subr.mxu0 0.0
    %1245 = vmatpush1.msra.mxu0 %v387
    %1246 = vmatprep.subr.mxu0 0.0
    %1247 = vmatpush1.msra.mxu0 %v388
    %1248 = vmatprep.subr.mxu0 0.0
    %1249 = vmatpush1.msra.mxu0 %v389
    %1250 = vmatprep.subr.mxu0 0.0
    %1251 = vmatpush1.msra.mxu0 %v390
    %1252 = vmatprep.subr.mxu0 0.0
    %1253 = vmatpush1.msra.mxu0 %v391
    %1254 = vmatprep.mubr.f32.mxu0 %v53
    %1255 = vmatmul.mubr.f32.gmra.mrb[0].mxu0 %v52
    %v1256 = vpop.f32.mrb[0].mxu0
    %v1257 = vadd.f32 %v1172, %v1256
    %v1258 = vpop.f32.mrb[0].mxu0
    %1259 = vmatprep.mubr.f32.mxu0 %v85
    %1260 = vmatmul.mubr.f32.gmra.mrb[0].mxu0 %v84
    %v1261 = vpop.f32.mrb[0].mxu0
    %v1262 = vadd.f32 %v1177, %v1261
    %v1263 = vpop.f32.mrb[0].mxu0
    %1264 = vmatprep.mubr.f32.mxu0 %v117
    %1265 = vmatmul.mubr.f32.gmra.mrb[0].mxu0 %v116
    %v1266 = vpop.f32.mrb[0].mxu0
    %v1267 = vadd.f32 %v1182, %v1266
    %v1268 = vpop.f32.mrb[0].mxu0
    %1269 = vmatprep.mubr.f32.mxu0 %v149
    %1270 = vmatmul.mubr.f32.gmra.mrb[0].mxu0 %v148
    %v1271 = vpop.f32.mrb[0].mxu0
    %v1272 = vadd.f32 %v1187, %v1271
    %v1273 = vpop.f32.mrb[0].mxu0
    %1274 = vdwg.mxu0
    %1275 = vmatprep.subr.mxu0 0.0
    %1276 = vmatpush1.msra.mxu0 %v392
    %1277 = vmatprep.subr.mxu0 0.0
    %1278 = vmatpush1.msra.mxu0 %v393
    %1279 = vmatprep.subr.mxu0 0.0
    %1280 = vmatpush1.msra.mxu0 %v394
    %1281 = vmatprep.subr.mxu0 0.0
    %1282 = vmatpush1.msra.mxu0 %v395
    %1283 = vmatprep.subr.mxu0 0.0
    %1284 = vmatpush1.msra.mxu0 %v396
    %1285 = vmatprep.subr.mxu0 0.0
    %1286 = vmatpush1.msra.mxu0 %v397
    %1287 = vmatprep.subr.mxu0 0.0
    %1288 = vmatpush1.msra.mxu0 %v398
    %1289 = vmatprep.subr.mxu0 0.0
    %1290 = vmatpush1.msra.mxu0 %v399
    %1291 = vmatprep.subr.mxu0 0.0
    %1292 = vmatpush1.msra.mxu0 %v400
    %1293 = vmatprep.subr.mxu0 0.0
    %1294 = vmatpush1.msra.mxu0 %v401
    %1295 = vmatprep.subr.mxu0 0.0
    %1296 = vmatpush1.msra.mxu0 %v402
    %1297 = vmatprep.subr.mxu0 0.0
    %1298 = vmatpush1.msra.mxu0 %v403
    %1299 = vmatprep.subr.mxu0 0.0
    %1300 = vmatpush1.msra.mxu0 %v404
    %1301 = vmatprep.subr.mxu0 0.0
    %1302 = vmatpush1.msra.mxu0 %v405
    %1303 = vmatprep.subr.mxu0 0.0
    %1304 = vmatpush1.msra.mxu0 %v406
    %1305 = vmatprep.subr.mxu0 0.0
    %1306 = vmatpush1.msra.mxu0 %v407
    %1307 = vmatprep.subr.mxu0 0.0
    %1308 = vmatpush1.msra.mxu0 %v408
    %1309 = vmatprep.subr.mxu0 0.0
    %1310 = vmatpush1.msra.mxu0 %v409
    %1311 = vmatprep.subr.mxu0 0.0
    %1312 = vmatpush1.msra.mxu0 %v410
    %1313 = vmatprep.subr.mxu0 0.0
    %1314 = vmatpush1.msra.mxu0 %v411
    %1315 = vmatprep.subr.mxu0 0.0
    %1316 = vmatpush1.msra.mxu0 %v412
    %1317 = vmatprep.subr.mxu0 0.0
    %1318 = vmatpush1.msra.mxu0 %v413
    %1319 = vmatprep.subr.mxu0 0.0
    %1320 = vmatpush1.msra.mxu0 %v414
    %1321 = vmatprep.subr.mxu0 0.0
    %1322 = vmatpush1.msra.mxu0 %v415
    %1323 = vmatprep.subr.mxu0 0.0
    %1324 = vmatpush1.msra.mxu0 %v416
    %1325 = vmatprep.subr.mxu0 0.0
    %1326 = vmatpush1.msra.mxu0 %v417
    %1327 = vmatprep.subr.mxu0 0.0
    %1328 = vmatpush1.msra.mxu0 %v418
    %1329 = vmatprep.subr.mxu0 0.0
    %1330 = vmatpush1.msra.mxu0 %v419
    %1331 = vmatprep.subr.mxu0 0.0
    %1332 = vmatpush1.msra.mxu0 %v420
    %1333 = vmatprep.subr.mxu0 0.0
    %1334 = vmatpush1.msra.mxu0 %v421
    %1335 = vmatprep.subr.mxu0 0.0
    %1336 = vmatpush1.msra.mxu0 %v422
    %1337 = vmatprep.subr.mxu0 0.0
    %1338 = vmatpush1.msra.mxu0 %v423
    %1339 = vmatprep.mubr.f32.mxu0 %v55
    %1340 = vmatmul.mubr.f32.gmra.mrb[0].mxu0 %v54
    %v1341 = vpop.f32.mrb[0].mxu0
    %v1342 = vadd.f32 %v1257, %v1341
    %v1343 = vpop.f32.mrb[0].mxu0
    %1344 = vmatprep.mubr.f32.mxu0 %v87
    %1345 = vmatmul.mubr.f32.gmra.mrb[0].mxu0 %v86
    %v1346 = vpop.f32.mrb[0].mxu0
    %v1347 = vadd.f32 %v1262, %v1346
    %v1348 = vpop.f32.mrb[0].mxu0
    %1349 = vmatprep.mubr.f32.mxu0 %v119
    %1350 = vmatmul.mubr.f32.gmra.mrb[0].mxu0 %v118
    %v1351 = vpop.f32.mrb[0].mxu0
    %v1352 = vadd.f32 %v1267, %v1351
    %v1353 = vpop.f32.mrb[0].mxu0
    %1354 = vmatprep.mubr.f32.mxu0 %v151
    %1355 = vmatmul.mubr.f32.gmra.mrb[0].mxu0 %v150
    %v1356 = vpop.f32.mrb[0].mxu0
    %v1357 = vadd.f32 %v1272, %v1356
    %v1358 = vpop.f32.mrb[0].mxu0
    %1359 = vdwg.mxu0
    %1360 = vmatprep.subr.mxu0 0.0
    %1361 = vmatpush1.msra.mxu0 %v424
    %1362 = vmatprep.subr.mxu0 0.0
    %1363 = vmatpush1.msra.mxu0 %v425
    %1364 = vmatprep.subr.mxu0 0.0
    %1365 = vmatpush1.msra.mxu0 %v426
    %1366 = vmatprep.subr.mxu0 0.0
    %1367 = vmatpush1.msra.mxu0 %v427
    %1368 = vmatprep.subr.mxu0 0.0
    %1369 = vmatpush1.msra.mxu0 %v428
    %1370 = vmatprep.subr.mxu0 0.0
    %1371 = vmatpush1.msra.mxu0 %v429
    %1372 = vmatprep.subr.mxu0 0.0
    %1373 = vmatpush1.msra.mxu0 %v430
    %1374 = vmatprep.subr.mxu0 0.0
    %1375 = vmatpush1.msra.mxu0 %v431
    %1376 = vmatprep.subr.mxu0 0.0
    %1377 = vmatpush1.msra.mxu0 %v432
    %1378 = vmatprep.subr.mxu0 0.0
    %1379 = vmatpush1.msra.mxu0 %v433
    %1380 = vmatprep.subr.mxu0 0.0
    %1381 = vmatpush1.msra.mxu0 %v434
    %1382 = vmatprep.subr.mxu0 0.0
    %1383 = vmatpush1.msra.mxu0 %v435
    %1384 = vmatprep.subr.mxu0 0.0
    %1385 = vmatpush1.msra.mxu0 %v436
    %1386 = vmatprep.subr.mxu0 0.0
    %1387 = vmatpush1.msra.mxu0 %v437
    %1388 = vmatprep.subr.mxu0 0.0
    %1389 = vmatpush1.msra.mxu0 %v438
    %1390 = vmatprep.subr.mxu0 0.0
    %1391 = vmatpush1.msra.mxu0 %v439
    %1392 = vmatprep.subr.mxu0 0.0
    %1393 = vmatpush1.msra.mxu0 %v440
    %1394 = vmatprep.subr.mxu0 0.0
    %1395 = vmatpush1.msra.mxu0 %v441
    %1396 = vmatprep.subr.mxu0 0.0
    %1397 = vmatpush1.msra.mxu0 %v442
    %1398 = vmatprep.subr.mxu0 0.0
    %1399 = vmatpush1.msra.mxu0 %v443
    %1400 = vmatprep.subr.mxu0 0.0
    %1401 = vmatpush1.msra.mxu0 %v444
    %1402 = vmatprep.subr.mxu0 0.0
    %1403 = vmatpush1.msra.mxu0 %v445
    %1404 = vmatprep.subr.mxu0 0.0
    %1405 = vmatpush1.msra.mxu0 %v446
    %1406 = vmatprep.subr.mxu0 0.0
    %1407 = vmatpush1.msra.mxu0 %v447
    %1408 = vmatprep.subr.mxu0 0.0
    %1409 = vmatpush1.msra.mxu0 %v448
    %1410 = vmatprep.subr.mxu0 0.0
    %1411 = vmatpush1.msra.mxu0 %v449
    %1412 = vmatprep.subr.mxu0 0.0
    %1413 = vmatpush1.msra.mxu0 %v450
    %1414 = vmatprep.subr.mxu0 0.0
    %1415 = vmatpush1.msra.mxu0 %v451
    %1416 = vmatprep.subr.mxu0 0.0
    %1417 = vmatpush1.msra.mxu0 %v452
    %1418 = vmatprep.subr.mxu0 0.0
    %1419 = vmatpush1.msra.mxu0 %v453
    %1420 = vmatprep.subr.mxu0 0.0
    %1421 = vmatpush1.msra.mxu0 %v454
    %1422 = vmatprep.subr.mxu0 0.0
    %1423 = vmatpush1.msra.mxu0 %v455
    %1424 = vmatprep.mubr.f32.mxu0 %v57
    %1425 = vmatmul.mubr.f32.gmra.mrb[0].mxu0 %v56
    %v1426 = vpop.f32.mrb[0].mxu0
    %v1427 = vadd.f32 %v1342, %v1426
    %v1428 = vpop.f32.mrb[0].mxu0
    %1429 = vmatprep.mubr.f32.mxu0 %v89
    %1430 = vmatmul.mubr.f32.gmra.mrb[0].mxu0 %v88
    %v1431 = vpop.f32.mrb[0].mxu0
    %v1432 = vadd.f32 %v1347, %v1431
    %v1433 = vpop.f32.mrb[0].mxu0
    %1434 = vmatprep.mubr.f32.mxu0 %v121
    %1435 = vmatmul.mubr.f32.gmra.mrb[0].mxu0 %v120
    %v1436 = vpop.f32.mrb[0].mxu0
    %v1437 = vadd.f32 %v1352, %v1436
    %v1438 = vpop.f32.mrb[0].mxu0
    %1439 = vmatprep.mubr.f32.mxu0 %v153
    %1440 = vmatmul.mubr.f32.gmra.mrb[0].mxu0 %v152
    %v1441 = vpop.f32.mrb[0].mxu0
    %v1442 = vadd.f32 %v1357, %v1441
    %v1443 = vpop.f32.mrb[0].mxu0
    %1444 = vdwg.mxu0
    %1445 = vmatprep.subr.mxu0 0.0
    %1446 = vmatpush1.msra.mxu0 %v456
    %1447 = vmatprep.subr.mxu0 0.0
    %1448 = vmatpush1.msra.mxu0 %v457
    %1449 = vmatprep.subr.mxu0 0.0
    %1450 = vmatpush1.msra.mxu0 %v458
    %1451 = vmatprep.subr.mxu0 0.0
    %1452 = vmatpush1.msra.mxu0 %v459
    %1453 = vmatprep.subr.mxu0 0.0
    %1454 = vmatpush1.msra.mxu0 %v460
    %1455 = vmatprep.subr.mxu0 0.0
    %1456 = vmatpush1.msra.mxu0 %v461
    %1457 = vmatprep.subr.mxu0 0.0
    %1458 = vmatpush1.msra.mxu0 %v462
    %1459 = vmatprep.subr.mxu0 0.0
    %1460 = vmatpush1.msra.mxu0 %v463
    %1461 = vmatprep.subr.mxu0 0.0
    %1462 = vmatpush1.msra.mxu0 %v464
    %1463 = vmatprep.subr.mxu0 0.0
    %1464 = vmatpush1.msra.mxu0 %v465
    %1465 = vmatprep.subr.mxu0 0.0
    %1466 = vmatpush1.msra.mxu0 %v466
    %1467 = vmatprep.subr.mxu0 0.0
    %1468 = vmatpush1.msra.mxu0 %v467
    %1469 = vmatprep.subr.mxu0 0.0
    %1470 = vmatpush1.msra.mxu0 %v468
    %1471 = vmatprep.subr.mxu0 0.0
    %1472 = vmatpush1.msra.mxu0 %v469
    %1473 = vmatprep.subr.mxu0 0.0
    %1474 = vmatpush1.msra.mxu0 %v470
    %1475 = vmatprep.subr.mxu0 0.0
    %1476 = vmatpush1.msra.mxu0 %v471
    %1477 = vmatprep.subr.mxu0 0.0
    %1478 = vmatpush1.msra.mxu0 %v472
    %1479 = vmatprep.subr.mxu0 0.0
    %1480 = vmatpush1.msra.mxu0 %v473
    %1481 = vmatprep.subr.mxu0 0.0
    %1482 = vmatpush1.msra.mxu0 %v474
    %1483 = vmatprep.subr.mxu0 0.0
    %1484 = vmatpush1.msra.mxu0 %v475
    %1485 = vmatprep.subr.mxu0 0.0
    %1486 = vmatpush1.msra.mxu0 %v476
    %1487 = vmatprep.subr.mxu0 0.0
    %1488 = vmatpush1.msra.mxu0 %v477
    %1489 = vmatprep.subr.mxu0 0.0
    %1490 = vmatpush1.msra.mxu0 %v478
    %1491 = vmatprep.subr.mxu0 0.0
    %1492 = vmatpush1.msra.mxu0 %v479
    %1493 = vmatprep.subr.mxu0 0.0
    %1494 = vmatpush1.msra.mxu0 %v480
    %1495 = vmatprep.subr.mxu0 0.0
    %1496 = vmatpush1.msra.mxu0 %v481
    %1497 = vmatprep.subr.mxu0 0.0
    %1498 = vmatpush1.msra.mxu0 %v482
    %1499 = vmatprep.subr.mxu0 0.0
    %1500 = vmatpush1.msra.mxu0 %v483
    %1501 = vmatprep.subr.mxu0 0.0
    %1502 = vmatpush1.msra.mxu0 %v484
    %1503 = vmatprep.subr.mxu0 0.0
    %1504 = vmatpush1.msra.mxu0 %v485
    %1505 = vmatprep.subr.mxu0 0.0
    %1506 = vmatpush1.msra.mxu0 %v486
    %1507 = vmatprep.subr.mxu0 0.0
    %1508 = vmatpush1.msra.mxu0 %v487
    %1509 = vmatprep.mubr.f32.mxu0 %v59
    %1510 = vmatmul.mubr.f32.gmra.mrb[0].mxu0 %v58
    %v1511 = vpop.f32.mrb[0].mxu0
    %v1512 = vadd.f32 %v1427, %v1511
    %v1513 = vpop.f32.mrb[0].mxu0
    %1514 = vmatprep.mubr.f32.mxu0 %v91
    %1515 = vmatmul.mubr.f32.gmra.mrb[0].mxu0 %v90
    %v1516 = vpop.f32.mrb[0].mxu0
    %v1517 = vadd.f32 %v1432, %v1516
    %v1518 = vpop.f32.mrb[0].mxu0
    %1519 = vmatprep.mubr.f32.mxu0 %v123
    %1520 = vmatmul.mubr.f32.gmra.mrb[0].mxu0 %v122
    %v1521 = vpop.f32.mrb[0].mxu0
    %v1522 = vadd.f32 %v1437, %v1521
    %v1523 = vpop.f32.mrb[0].mxu0
    %1524 = vmatprep.mubr.f32.mxu0 %v155
    %1525 = vmatmul.mubr.f32.gmra.mrb[0].mxu0 %v154
    %v1526 = vpop.f32.mrb[0].mxu0
    %v1527 = vadd.f32 %v1442, %v1526
    %v1528 = vpop.f32.mrb[0].mxu0
    %1529 = vdwg.mxu0
    %1530 = vmatprep.subr.mxu0 0.0
    %1531 = vmatpush1.msra.mxu0 %v488
    %1532 = vmatprep.subr.mxu0 0.0
    %1533 = vmatpush1.msra.mxu0 %v489
    %1534 = vmatprep.subr.mxu0 0.0
    %1535 = vmatpush1.msra.mxu0 %v490
    %1536 = vmatprep.subr.mxu0 0.0
    %1537 = vmatpush1.msra.mxu0 %v491
    %1538 = vmatprep.subr.mxu0 0.0
    %1539 = vmatpush1.msra.mxu0 %v492
    %1540 = vmatprep.subr.mxu0 0.0
    %1541 = vmatpush1.msra.mxu0 %v493
    %1542 = vmatprep.subr.mxu0 0.0
    %1543 = vmatpush1.msra.mxu0 %v494
    %1544 = vmatprep.subr.mxu0 0.0
    %1545 = vmatpush1.msra.mxu0 %v495
    %1546 = vmatprep.subr.mxu0 0.0
    %1547 = vmatpush1.msra.mxu0 %v496
    %1548 = vmatprep.subr.mxu0 0.0
    %1549 = vmatpush1.msra.mxu0 %v497
    %1550 = vmatprep.subr.mxu0 0.0
    %1551 = vmatpush1.msra.mxu0 %v498
    %1552 = vmatprep.subr.mxu0 0.0
    %1553 = vmatpush1.msra.mxu0 %v499
    %1554 = vmatprep.subr.mxu0 0.0
    %1555 = vmatpush1.msra.mxu0 %v500
    %1556 = vmatprep.subr.mxu0 0.0
    %1557 = vmatpush1.msra.mxu0 %v501
    %1558 = vmatprep.subr.mxu0 0.0
    %1559 = vmatpush1.msra.mxu0 %v502
    %1560 = vmatprep.subr.mxu0 0.0
    %1561 = vmatpush1.msra.mxu0 %v503
    %1562 = vmatprep.subr.mxu0 0.0
    %1563 = vmatpush1.msra.mxu0 %v504
    %1564 = vmatprep.subr.mxu0 0.0
    %1565 = vmatpush1.msra.mxu0 %v505
    %1566 = vmatprep.subr.mxu0 0.0
    %1567 = vmatpush1.msra.mxu0 %v506
    %1568 = vmatprep.subr.mxu0 0.0
    %1569 = vmatpush1.msra.mxu0 %v507
    %1570 = vmatprep.subr.mxu0 0.0
    %1571 = vmatpush1.msra.mxu0 %v508
    %1572 = vmatprep.subr.mxu0 0.0
    %1573 = vmatpush1.msra.mxu0 %v509
    %1574 = vmatprep.subr.mxu0 0.0
    %1575 = vmatpush1.msra.mxu0 %v510
    %1576 = vmatprep.subr.mxu0 0.0
    %1577 = vmatpush1.msra.mxu0 %v511
    %1578 = vmatprep.subr.mxu0 0.0
    %1579 = vmatpush1.msra.mxu0 %v512
    %1580 = vmatprep.subr.mxu0 0.0
    %1581 = vmatpush1.msra.mxu0 %v513
    %1582 = vmatprep.subr.mxu0 0.0
    %1583 = vmatpush1.msra.mxu0 %v514
    %1584 = vmatprep.subr.mxu0 0.0
    %1585 = vmatpush1.msra.mxu0 %v515
    %1586 = vmatprep.subr.mxu0 0.0
    %1587 = vmatpush1.msra.mxu0 %v516
    %1588 = vmatprep.subr.mxu0 0.0
    %1589 = vmatpush1.msra.mxu0 %v517
    %1590 = vmatprep.subr.mxu0 0.0
    %1591 = vmatpush1.msra.mxu0 %v518
    %1592 = vmatprep.subr.mxu0 0.0
    %1593 = vmatpush1.msra.mxu0 %v519
    %1594 = vmatprep.mubr.f32.mxu0 %v61
    %1595 = vmatmul.mubr.f32.gmra.mrb[0].mxu0 %v60
    %v1596 = vpop.f32.mrb[0].mxu0
    %v1597 = vadd.f32 %v1512, %v1596
    %v1598 = vpop.f32.mrb[0].mxu0
    %1599 = vmatprep.mubr.f32.mxu0 %v93
    %1600 = vmatmul.mubr.f32.gmra.mrb[0].mxu0 %v92
    %v1601 = vpop.f32.mrb[0].mxu0
    %v1602 = vadd.f32 %v1517, %v1601
    %v1603 = vpop.f32.mrb[0].mxu0
    %1604 = vmatprep.mubr.f32.mxu0 %v125
    %1605 = vmatmul.mubr.f32.gmra.mrb[0].mxu0 %v124
    %v1606 = vpop.f32.mrb[0].mxu0
    %v1607 = vadd.f32 %v1522, %v1606
    %v1608 = vpop.f32.mrb[0].mxu0
    %1609 = vmatprep.mubr.f32.mxu0 %v157
    %1610 = vmatmul.mubr.f32.gmra.mrb[0].mxu0 %v156
    %v1611 = vpop.f32.mrb[0].mxu0
    %v1612 = vadd.f32 %v1527, %v1611
    %v1613 = vpop.f32.mrb[0].mxu0
    %1614 = vdwg.mxu0
    %1615 = vmatprep.subr.mxu0 0.0
    %1616 = vmatpush1.msra.mxu0 %v520
    %1617 = vmatprep.subr.mxu0 0.0
    %1618 = vmatpush1.msra.mxu0 %v521
    %1619 = vmatprep.subr.mxu0 0.0
    %1620 = vmatpush1.msra.mxu0 %v522
    %1621 = vmatprep.subr.mxu0 0.0
    %1622 = vmatpush1.msra.mxu0 %v523
    %1623 = vmatprep.subr.mxu0 0.0
    %1624 = vmatpush1.msra.mxu0 %v524
    %1625 = vmatprep.subr.mxu0 0.0
    %1626 = vmatpush1.msra.mxu0 %v525
    %1627 = vmatprep.subr.mxu0 0.0
    %1628 = vmatpush1.msra.mxu0 %v526
    %1629 = vmatprep.subr.mxu0 0.0
    %1630 = vmatpush1.msra.mxu0 %v527
    %1631 = vmatprep.subr.mxu0 0.0
    %1632 = vmatpush1.msra.mxu0 %v528
    %1633 = vmatprep.subr.mxu0 0.0
    %1634 = vmatpush1.msra.mxu0 %v529
    %1635 = vmatprep.subr.mxu0 0.0
    %1636 = vmatpush1.msra.mxu0 %v530
    %1637 = vmatprep.subr.mxu0 0.0
    %1638 = vmatpush1.msra.mxu0 %v531
    %1639 = vmatprep.subr.mxu0 0.0
    %1640 = vmatpush1.msra.mxu0 %v532
    %1641 = vmatprep.subr.mxu0 0.0
    %1642 = vmatpush1.msra.mxu0 %v533
    %1643 = vmatprep.subr.mxu0 0.0
    %1644 = vmatpush1.msra.mxu0 %v534
    %1645 = vmatprep.subr.mxu0 0.0
    %1646 = vmatpush1.msra.mxu0 %v535
    %1647 = vmatprep.subr.mxu0 0.0
    %1648 = vmatpush1.msra.mxu0 %v536
    %1649 = vmatprep.subr.mxu0 0.0
    %1650 = vmatpush1.msra.mxu0 %v537
    %1651 = vmatprep.subr.mxu0 0.0
    %1652 = vmatpush1.msra.mxu0 %v538
    %1653 = vmatprep.subr.mxu0 0.0
    %1654 = vmatpush1.msra.mxu0 %v539
    %1655 = vmatprep.subr.mxu0 0.0
    %1656 = vmatpush1.msra.mxu0 %v540
    %1657 = vmatprep.subr.mxu0 0.0
    %1658 = vmatpush1.msra.mxu0 %v541
    %1659 = vmatprep.subr.mxu0 0.0
    %1660 = vmatpush1.msra.mxu0 %v542
    %1661 = vmatprep.subr.mxu0 0.0
    %1662 = vmatpush1.msra.mxu0 %v543
    %1663 = vmatprep.subr.mxu0 0.0
    %1664 = vmatpush1.msra.mxu0 %v544
    %1665 = vmatprep.subr.mxu0 0.0
    %1666 = vmatpush1.msra.mxu0 %v545
    %1667 = vmatprep.subr.mxu0 0.0
    %1668 = vmatpush1.msra.mxu0 %v546
    %1669 = vmatprep.subr.mxu0 0.0
    %1670 = vmatpush1.msra.mxu0 %v547
    %1671 = vmatprep.subr.mxu0 0.0
    %1672 = vmatpush1.msra.mxu0 %v548
    %1673 = vmatprep.subr.mxu0 0.0
    %1674 = vmatpush1.msra.mxu0 %v549
    %1675 = vmatprep.subr.mxu0 0.0
    %1676 = vmatpush1.msra.mxu0 %v550
    %1677 = vmatprep.subr.mxu0 0.0
    %1678 = vmatpush1.msra.mxu0 %v551
    %1679 = vmatprep.mubr.f32.mxu0 %v63
    %1680 = vmatmul.mubr.f32.gmra.mrb[0].mxu0 %v62
    %v1681 = vpop.f32.mrb[0].mxu0
    %v1682 = vadd.f32 %v1597, %v1681
    %v1683 = vpop.f32.mrb[0].mxu0
    %1684 = vmatprep.mubr.f32.mxu0 %v95
    %1685 = vmatmul.mubr.f32.gmra.mrb[0].mxu0 %v94
    %v1686 = vpop.f32.mrb[0].mxu0
    %v1687 = vadd.f32 %v1602, %v1686
    %v1688 = vpop.f32.mrb[0].mxu0
    %1689 = vmatprep.mubr.f32.mxu0 %v127
    %1690 = vmatmul.mubr.f32.gmra.mrb[0].mxu0 %v126
    %v1691 = vpop.f32.mrb[0].mxu0
    %v1692 = vadd.f32 %v1607, %v1691
    %v1693 = vpop.f32.mrb[0].mxu0
    %1694 = vmatprep.mubr.f32.mxu0 %v159
    %1695 = vmatmul.mubr.f32.gmra.mrb[0].mxu0 %v158
    %v1696 = vpop.f32.mrb[0].mxu0
    %v1697 = vadd.f32 %v1612, %v1696
    %v1698 = vpop.f32.mrb[0].mxu0
    %1699 = vdwg.mxu0
    %1700 = vmatprep.subr.mxu0 0.0
    %1701 = vmatpush1.msra.mxu0 %v552
    %1702 = vmatprep.subr.mxu0 0.0
    %1703 = vmatpush1.msra.mxu0 %v553
    %1704 = vmatprep.subr.mxu0 0.0
    %1705 = vmatpush1.msra.mxu0 %v554
    %1706 = vmatprep.subr.mxu0 0.0
    %1707 = vmatpush1.msra.mxu0 %v555
    %1708 = vmatprep.subr.mxu0 0.0
    %1709 = vmatpush1.msra.mxu0 %v556
    %1710 = vmatprep.subr.mxu0 0.0
    %1711 = vmatpush1.msra.mxu0 %v557
    %1712 = vmatprep.subr.mxu0 0.0
    %1713 = vmatpush1.msra.mxu0 %v558
    %1714 = vmatprep.subr.mxu0 0.0
    %1715 = vmatpush1.msra.mxu0 %v559
    %1716 = vmatprep.subr.mxu0 0.0
    %1717 = vmatpush1.msra.mxu0 %v560
    %1718 = vmatprep.subr.mxu0 0.0
    %1719 = vmatpush1.msra.mxu0 %v561
    %1720 = vmatprep.subr.mxu0 0.0
    %1721 = vmatpush1.msra.mxu0 %v562
    %1722 = vmatprep.subr.mxu0 0.0
    %1723 = vmatpush1.msra.mxu0 %v563
    %1724 = vmatprep.subr.mxu0 0.0
    %1725 = vmatpush1.msra.mxu0 %v564
    %1726 = vmatprep.subr.mxu0 0.0
    %1727 = vmatpush1.msra.mxu0 %v565
    %1728 = vmatprep.subr.mxu0 0.0
    %1729 = vmatpush1.msra.mxu0 %v566
    %1730 = vmatprep.subr.mxu0 0.0
    %1731 = vmatpush1.msra.mxu0 %v567
    %1732 = vmatprep.subr.mxu0 0.0
    %1733 = vmatpush1.msra.mxu0 %v568
    %1734 = vmatprep.subr.mxu0 0.0
    %1735 = vmatpush1.msra.mxu0 %v569
    %1736 = vmatprep.subr.mxu0 0.0
    %1737 = vmatpush1.msra.mxu0 %v570
    %1738 = vmatprep.subr.mxu0 0.0
    %1739 = vmatpush1.msra.mxu0 %v571
    %1740 = vmatprep.subr.mxu0 0.0
    %1741 = vmatpush1.msra.mxu0 %v572
    %1742 = vmatprep.subr.mxu0 0.0
    %1743 = vmatpush1.msra.mxu0 %v573
    %1744 = vmatprep.subr.mxu0 0.0
    %1745 = vmatpush1.msra.mxu0 %v574
    %1746 = vmatprep.subr.mxu0 0.0
    %1747 = vmatpush1.msra.mxu0 %v575
    %1748 = vmatprep.subr.mxu0 0.0
    %1749 = vmatpush1.msra.mxu0 %v576
    %1750 = vmatprep.subr.mxu0 0.0
    %1751 = vmatpush1.msra.mxu0 %v577
    %1752 = vmatprep.subr.mxu0 0.0
    %1753 = vmatpush1.msra.mxu0 %v578
    %1754 = vmatprep.subr.mxu0 0.0
    %1755 = vmatpush1.msra.mxu0 %v579
    %1756 = vmatprep.subr.mxu0 0.0
    %1757 = vmatpush1.msra.mxu0 %v580
    %1758 = vmatprep.subr.mxu0 0.0
    %1759 = vmatpush1.msra.mxu0 %v581
    %1760 = vmatprep.subr.mxu0 0.0
    %1761 = vmatpush1.msra.mxu0 %v582
    %1762 = vmatprep.subr.mxu0 0.0
    %1763 = vmatpush1.msra.mxu0 %v583
    %1764 = vmatprep.mubr.f32.mxu0 %v65
    %1765 = vmatmul.mubr.f32.gmra.mrb[0].mxu0 %v64
    %v1766 = vpop.f32.mrb[0].mxu0
    %v1767 = vadd.f32 %v1682, %v1766
    %v1768 = vpop.f32.mrb[0].mxu0
    %1769 = vmatprep.mubr.f32.mxu0 %v97
    %1770 = vmatmul.mubr.f32.gmra.mrb[0].mxu0 %v96
    %v1771 = vpop.f32.mrb[0].mxu0
    %v1772 = vadd.f32 %v1687, %v1771
    %v1773 = vpop.f32.mrb[0].mxu0
    %1774 = vmatprep.mubr.f32.mxu0 %v129
    %1775 = vmatmul.mubr.f32.gmra.mrb[0].mxu0 %v128
    %v1776 = vpop.f32.mrb[0].mxu0
    %v1777 = vadd.f32 %v1692, %v1776
    %v1778 = vpop.f32.mrb[0].mxu0
    %1779 = vmatprep.mubr.f32.mxu0 %v161
    %1780 = vmatmul.mubr.f32.gmra.mrb[0].mxu0 %v160
    %v1781 = vpop.f32.mrb[0].mxu0
    %v1782 = vadd.f32 %v1697, %v1781
    %v1783 = vpop.f32.mrb[0].mxu0
    %1784 = vdwg.mxu0
    %1785 = vmatprep.subr.mxu0 0.0
    %1786 = vmatpush1.msra.mxu0 %v584
    %1787 = vmatprep.subr.mxu0 0.0
    %1788 = vmatpush1.msra.mxu0 %v585
    %1789 = vmatprep.subr.mxu0 0.0
    %1790 = vmatpush1.msra.mxu0 %v586
    %1791 = vmatprep.subr.mxu0 0.0
    %1792 = vmatpush1.msra.mxu0 %v587
    %1793 = vmatprep.subr.mxu0 0.0
    %1794 = vmatpush1.msra.mxu0 %v588
    %1795 = vmatprep.subr.mxu0 0.0
    %1796 = vmatpush1.msra.mxu0 %v589
    %1797 = vmatprep.subr.mxu0 0.0
    %1798 = vmatpush1.msra.mxu0 %v590
    %1799 = vmatprep.subr.mxu0 0.0
    %1800 = vmatpush1.msra.mxu0 %v591
    %1801 = vmatprep.subr.mxu0 0.0
    %1802 = vmatpush1.msra.mxu0 %v592
    %1803 = vmatprep.subr.mxu0 0.0
    %1804 = vmatpush1.msra.mxu0 %v593
    %1805 = vmatprep.subr.mxu0 0.0
    %1806 = vmatpush1.msra.mxu0 %v594
    %1807 = vmatprep.subr.mxu0 0.0
    %1808 = vmatpush1.msra.mxu0 %v595
    %1809 = vmatprep.subr.mxu0 0.0
    %1810 = vmatpush1.msra.mxu0 %v596
    %1811 = vmatprep.subr.mxu0 0.0
    %1812 = vmatpush1.msra.mxu0 %v597
    %1813 = vmatprep.subr.mxu0 0.0
    %1814 = vmatpush1.msra.mxu0 %v598
    %1815 = vmatprep.subr.mxu0 0.0
    %1816 = vmatpush1.msra.mxu0 %v599
    %1817 = vmatprep.subr.mxu0 0.0
    %1818 = vmatpush1.msra.mxu0 %v600
    %1819 = vmatprep.subr.mxu0 0.0
    %1820 = vmatpush1.msra.mxu0 %v601
    %1821 = vmatprep.subr.mxu0 0.0
    %1822 = vmatpush1.msra.mxu0 %v602
    %1823 = vmatprep.subr.mxu0 0.0
    %1824 = vmatpush1.msra.mxu0 %v603
    %1825 = vmatprep.subr.mxu0 0.0
    %1826 = vmatpush1.msra.mxu0 %v604
    %1827 = vmatprep.subr.mxu0 0.0
    %1828 = vmatpush1.msra.mxu0 %v605
    %1829 = vmatprep.subr.mxu0 0.0
    %1830 = vmatpush1.msra.mxu0 %v606
    %1831 = vmatprep.subr.mxu0 0.0
    %1832 = vmatpush1.msra.mxu0 %v607
    %1833 = vmatprep.subr.mxu0 0.0
    %1834 = vmatpush1.msra.mxu0 %v608
    %1835 = vmatprep.subr.mxu0 0.0
    %1836 = vmatpush1.msra.mxu0 %v609
    %1837 = vmatprep.subr.mxu0 0.0
    %1838 = vmatpush1.msra.mxu0 %v610
    %1839 = vmatprep.subr.mxu0 0.0
    %1840 = vmatpush1.msra.mxu0 %v611
    %1841 = vmatprep.subr.mxu0 0.0
    %1842 = vmatpush1.msra.mxu0 %v612
    %1843 = vmatprep.subr.mxu0 0.0
    %1844 = vmatpush1.msra.mxu0 %v613
    %1845 = vmatprep.subr.mxu0 0.0
    %1846 = vmatpush1.msra.mxu0 %v614
    %1847 = vmatprep.subr.mxu0 0.0
    %1848 = vmatpush1.msra.mxu0 %v615
    %1849 = vmatprep.mubr.f32.mxu0 %v67
    %1850 = vmatmul.mubr.f32.gmra.mrb[0].mxu0 %v66
    %v1851 = vpop.f32.mrb[0].mxu0
    %v1852 = vadd.f32 %v1767, %v1851
    %v1853 = vpop.f32.mrb[0].mxu0
    %1854 = vmatprep.mubr.f32.mxu0 %v99
    %1855 = vmatmul.mubr.f32.gmra.mrb[0].mxu0 %v98
    %v1856 = vpop.f32.mrb[0].mxu0
    %v1857 = vadd.f32 %v1772, %v1856
    %v1858 = vpop.f32.mrb[0].mxu0
    %1859 = vmatprep.mubr.f32.mxu0 %v131
    %1860 = vmatmul.mubr.f32.gmra.mrb[0].mxu0 %v130
    %v1861 = vpop.f32.mrb[0].mxu0
    %v1862 = vadd.f32 %v1777, %v1861
    %v1863 = vpop.f32.mrb[0].mxu0
    %1864 = vmatprep.mubr.f32.mxu0 %v163
    %1865 = vmatmul.mubr.f32.gmra.mrb[0].mxu0 %v162
    %v1866 = vpop.f32.mrb[0].mxu0
    %v1867 = vadd.f32 %v1782, %v1866
    %v1868 = vpop.f32.mrb[0].mxu0
    %1869 = vdwg.mxu0
    %1870 = vmatprep.subr.mxu0 0.0
    %1871 = vmatpush1.msra.mxu0 %v616
    %1872 = vmatprep.subr.mxu0 0.0
    %1873 = vmatpush1.msra.mxu0 %v617
    %1874 = vmatprep.subr.mxu0 0.0
    %1875 = vmatpush1.msra.mxu0 %v618
    %1876 = vmatprep.subr.mxu0 0.0
    %1877 = vmatpush1.msra.mxu0 %v619
    %1878 = vmatprep.subr.mxu0 0.0
    %1879 = vmatpush1.msra.mxu0 %v620
    %1880 = vmatprep.subr.mxu0 0.0
    %1881 = vmatpush1.msra.mxu0 %v621
    %1882 = vmatprep.subr.mxu0 0.0
    %1883 = vmatpush1.msra.mxu0 %v622
    %1884 = vmatprep.subr.mxu0 0.0
    %1885 = vmatpush1.msra.mxu0 %v623
    %1886 = vmatprep.subr.mxu0 0.0
    %1887 = vmatpush1.msra.mxu0 %v624
    %1888 = vmatprep.subr.mxu0 0.0
    %1889 = vmatpush1.msra.mxu0 %v625
    %1890 = vmatprep.subr.mxu0 0.0
    %1891 = vmatpush1.msra.mxu0 %v626
    %1892 = vmatprep.subr.mxu0 0.0
    %1893 = vmatpush1.msra.mxu0 %v627
    %1894 = vmatprep.subr.mxu0 0.0
    %1895 = vmatpush1.msra.mxu0 %v628
    %1896 = vmatprep.subr.mxu0 0.0
    %1897 = vmatpush1.msra.mxu0 %v629
    %1898 = vmatprep.subr.mxu0 0.0
    %1899 = vmatpush1.msra.mxu0 %v630
    %1900 = vmatprep.subr.mxu0 0.0
    %1901 = vmatpush1.msra.mxu0 %v631
    %1902 = vmatprep.subr.mxu0 0.0
    %1903 = vmatpush1.msra.mxu0 %v632
    %1904 = vmatprep.subr.mxu0 0.0
    %1905 = vmatpush1.msra.mxu0 %v633
    %1906 = vmatprep.subr.mxu0 0.0
    %1907 = vmatpush1.msra.mxu0 %v634
    %1908 = vmatprep.subr.mxu0 0.0
    %1909 = vmatpush1.msra.mxu0 %v635
    %1910 = vmatprep.subr.mxu0 0.0
    %1911 = vmatpush1.msra.mxu0 %v636
    %1912 = vmatprep.subr.mxu0 0.0
    %1913 = vmatpush1.msra.mxu0 %v637
    %1914 = vmatprep.subr.mxu0 0.0
    %1915 = vmatpush1.msra.mxu0 %v638
    %1916 = vmatprep.subr.mxu0 0.0
    %1917 = vmatpush1.msra.mxu0 %v639
    %1918 = vmatprep.subr.mxu0 0.0
    %1919 = vmatpush1.msra.mxu0 %v640
    %1920 = vmatprep.subr.mxu0 0.0
    %1921 = vmatpush1.msra.mxu0 %v641
    %1922 = vmatprep.subr.mxu0 0.0
    %1923 = vmatpush1.msra.mxu0 %v642
    %1924 = vmatprep.subr.mxu0 0.0
    %1925 = vmatpush1.msra.mxu0 %v643
    %1926 = vmatprep.subr.mxu0 0.0
    %1927 = vmatpush1.msra.mxu0 %v644
    %1928 = vmatprep.subr.mxu0 0.0
    %1929 = vmatpush1.msra.mxu0 %v645
    %1930 = vmatprep.subr.mxu0 0.0
    %1931 = vmatpush1.msra.mxu0 %v646
    %1932 = vmatprep.subr.mxu0 0.0
    %1933 = vmatpush1.msra.mxu0 %v647
    %1934 = vmatprep.mubr.f32.mxu0 %v69
    %1935 = vmatmul.mubr.f32.gmra.mrb[0].mxu0 %v68
    %v1936 = vpop.f32.mrb[0].mxu0
    %v1937 = vadd.f32 %v1852, %v1936
    %v1938 = vpop.f32.mrb[0].mxu0
    %1939 = vmatprep.mubr.f32.mxu0 %v101
    %1940 = vmatmul.mubr.f32.gmra.mrb[0].mxu0 %v100
    %v1941 = vpop.f32.mrb[0].mxu0
    %v1942 = vadd.f32 %v1857, %v1941
    %v1943 = vpop.f32.mrb[0].mxu0
    %1944 = vmatprep.mubr.f32.mxu0 %v133
    %1945 = vmatmul.mubr.f32.gmra.mrb[0].mxu0 %v132
    %v1946 = vpop.f32.mrb[0].mxu0
    %v1947 = vadd.f32 %v1862, %v1946
    %v1948 = vpop.f32.mrb[0].mxu0
    %1949 = vmatprep.mubr.f32.mxu0 %v165
    %1950 = vmatmul.mubr.f32.gmra.mrb[0].mxu0 %v164
    %v1951 = vpop.f32.mrb[0].mxu0
    %v1952 = vadd.f32 %v1867, %v1951
    %v1953 = vpop.f32.mrb[0].mxu0
    %1954 = vdwg.mxu0
    %1955 = vmatprep.subr.mxu0 0.0
    %1956 = vmatpush1.msra.mxu0 %v648
    %1957 = vmatprep.subr.mxu0 0.0
    %1958 = vmatpush1.msra.mxu0 %v649
    %1959 = vmatprep.subr.mxu0 0.0
    %1960 = vmatpush1.msra.mxu0 %v650
    %1961 = vmatprep.subr.mxu0 0.0
    %1962 = vmatpush1.msra.mxu0 %v651
    %1963 = vmatprep.subr.mxu0 0.0
    %1964 = vmatpush1.msra.mxu0 %v652
    %1965 = vmatprep.subr.mxu0 0.0
    %1966 = vmatpush1.msra.mxu0 %v653
    %1967 = vmatprep.subr.mxu0 0.0
    %1968 = vmatpush1.msra.mxu0 %v654
    %1969 = vmatprep.subr.mxu0 0.0
    %1970 = vmatpush1.msra.mxu0 %v655
    %1971 = vmatprep.subr.mxu0 0.0
    %1972 = vmatpush1.msra.mxu0 %v656
    %1973 = vmatprep.subr.mxu0 0.0
    %1974 = vmatpush1.msra.mxu0 %v657
    %1975 = vmatprep.subr.mxu0 0.0
    %1976 = vmatpush1.msra.mxu0 %v658
    %1977 = vmatprep.subr.mxu0 0.0
    %1978 = vmatpush1.msra.mxu0 %v659
    %1979 = vmatprep.subr.mxu0 0.0
    %1980 = vmatpush1.msra.mxu0 %v660
    %1981 = vmatprep.subr.mxu0 0.0
    %1982 = vmatpush1.msra.mxu0 %v661
    %1983 = vmatprep.subr.mxu0 0.0
    %1984 = vmatpush1.msra.mxu0 %v662
    %1985 = vmatprep.subr.mxu0 0.0
    %1986 = vmatpush1.msra.mxu0 %v663
    %1987 = vmatprep.subr.mxu0 0.0
    %1988 = vmatpush1.msra.mxu0 %v664
    %1989 = vmatprep.subr.mxu0 0.0
    %1990 = vmatpush1.msra.mxu0 %v665
    %1991 = vmatprep.subr.mxu0 0.0
    %1992 = vmatpush1.msra.mxu0 %v666
    %1993 = vmatprep.subr.mxu0 0.0
    %1994 = vmatpush1.msra.mxu0 %v667
    %1995 = vmatprep.subr.mxu0 0.0
    %1996 = vmatpush1.msra.mxu0 %v668
    %1997 = vmatprep.subr.mxu0 0.0
    %1998 = vmatpush1.msra.mxu0 %v669
    %1999 = vmatprep.subr.mxu0 0.0
    %2000 = vmatpush1.msra.mxu0 %v670
    %2001 = vmatprep.subr.mxu0 0.0
    %2002 = vmatpush1.msra.mxu0 %v671
    %2003 = vmatprep.subr.mxu0 0.0
    %2004 = vmatpush1.msra.mxu0 %v672
    %2005 = vmatprep.subr.mxu0 0.0
    %2006 = vmatpush1.msra.mxu0 %v673
    %2007 = vmatprep.subr.mxu0 0.0
    %2008 = vmatpush1.msra.mxu0 %v674
    %2009 = vmatprep.subr.mxu0 0.0
    %2010 = vmatpush1.msra.mxu0 %v675
    %2011 = vmatprep.subr.mxu0 0.0
    %2012 = vmatpush1.msra.mxu0 %v676
    %2013 = vmatprep.subr.mxu0 0.0
    %2014 = vmatpush1.msra.mxu0 %v677
    %2015 = vmatprep.subr.mxu0 0.0
    %2016 = vmatpush1.msra.mxu0 %v678
    %2017 = vmatprep.subr.mxu0 0.0
    %2018 = vmatpush1.msra.mxu0 %v679
    %2019 = vmatprep.mubr.f32.mxu0 %v71
    %2020 = vmatmul.mubr.f32.gmra.mrb[0].mxu0 %v70
    %v2021 = vpop.f32.mrb[0].mxu0
    %v2022 = vadd.f32 %v1937, %v2021
    %v2023 = vpop.f32.mrb[0].mxu0
    %2024 = vmatprep.mubr.f32.mxu0 %v103
    %2025 = vmatmul.mubr.f32.gmra.mrb[0].mxu0 %v102
    %v2026 = vpop.f32.mrb[0].mxu0
    %v2027 = vadd.f32 %v1942, %v2026
    %v2028 = vpop.f32.mrb[0].mxu0
    %2029 = vmatprep.mubr.f32.mxu0 %v135
    %2030 = vmatmul.mubr.f32.gmra.mrb[0].mxu0 %v134
    %v2031 = vpop.f32.mrb[0].mxu0
    %v2032 = vadd.f32 %v1947, %v2031
    %v2033 = vpop.f32.mrb[0].mxu0
    %2034 = vmatprep.mubr.f32.mxu0 %v167
    %2035 = vmatmul.mubr.f32.gmra.mrb[0].mxu0 %v166
    %v2036 = vpop.f32.mrb[0].mxu0
    %v2037 = vadd.f32 %v1952, %v2036
    %v2038 = vpop.f32.mrb[0].mxu0
    %2039 = vdwg.mxu0
    %2040 = vst [vmem:[#allocation7] sm:$0xff] %v2022
    %2041 = vst [vmem:[#allocation7 + $0x8] sm:$0xff] %v2027
    %2042 = vst [vmem:[#allocation7 + $0x10] sm:$0xff] %v2032
    %2043 = vst [vmem:[#allocation7 + $0x18] sm:$0xff] %v2037
    // Predicated region
    $region18: #{tpu_custom_call.1} parent=1 // pred_check
      _
    $region19: #{tpu_custom_call.1} parent=1 // pred_check_branch
      %2045 = sbr.rel (0) target = $region21
    $region20: #{tpu_custom_call.1} parent=1 // pred_region
      %s2047 = ssub.s32 512, 512
      %2048 = vsyncadd [#allocation4], %s2047
      %s2049 = sshll.u32 [#allocation7], 4
      %s2050 = int_to_ptr.vmem [resolvable:$true] %s2049
      %2055 = dma.vmem_to_hbm [thread:$0]  %s2050, 512, %s2, [#allocation4], 128, 128, 8
    $region21: #{tpu_custom_call.1} parent=1 // pred_fallthru
      _
    // Predicated region
    $region22: #{tpu_custom_call.1} parent=1 // pred_check
      _
    $region23: #{tpu_custom_call.1} parent=1 // pred_check_branch
      %2057 = sbr.rel (0) target = $region25
    $region24: #{tpu_custom_call.1} parent=1 // pred_region
      %2058 = dma.done [#allocation4], 512
    $region25: #{tpu_custom_call.1} parent=1 // pred_fallthru
      _
    %2059 = vsyncpa [#allocation3], 1
    %2060 = vsyncpa [#allocation6], 1
    %2061 = vsyncpa [#allocation4], 1

</llo_original>
